<compile_context>
chip_gen: v5e
topology: v5e:2x2
jax: 0.10.0
libtpu: 0.0.40
codegen_flags: <defaults>
</compile_context>

<pallas_src>
import math

import jax
import jax.numpy as jnp
from jax.experimental import pallas as pl
from jax.experimental.pallas import tpu as pltpu

# ----------------------------------------------------------------------------
# Problem sizes (small, consistent with the module's forward pass)
# ----------------------------------------------------------------------------
BATCH = 2
IMG_H, IMG_W, IMG_C = 36, 36, 3          # obs['image'] (HWC uint8-style)
POSITION_DIMS = (8, 8)                   # [s.n for s in obs_space['position']]
N_ACTIONS = 4

CNN_FEATURES = 64                        # NatureCNN output_dim (small synthetic)
MAP_FEATURES = 32                        # Map(features_dim=32)
MAP_SHAPE = (MAP_FEATURES, POSITION_DIMS[0], POSITION_DIMS[1])
MAP_OUTPUT_DIM = 2 * MAP_FEATURES        # TODO(synk): Map.output_dim reconstructed
POS_NET_OUT = 64
MLP_HIDDEN = 64
HEAD_IN = MAP_OUTPUT_DIM + POS_NET_OUT   # 128 (policy/value input width)


# ----------------------------------------------------------------------------
# pallas_call helper: no grid, whole arrays resident in VMEM, cost estimate.
# ----------------------------------------------------------------------------
def _vmem_spec():
    return pl.BlockSpec(memory_space=pltpu.MemorySpace.VMEM)


def _nbytes(x):
    return math.prod(x.shape) * jnp.dtype(x.dtype).itemsize


def _pallas_dense(kernel, args, out_shape, flops):
    outs = out_shape if isinstance(out_shape, tuple) else (out_shape,)
    bytes_accessed = sum(_nbytes(a) for a in args) + sum(_nbytes(o) for o in outs)
    out_specs = tuple(_vmem_spec() for _ in outs)
    if not isinstance(out_shape, tuple):
        out_specs = out_specs[0]
    return pl.pallas_call(
        kernel,
        out_shape=out_shape,
        in_specs=[_vmem_spec() for _ in args],
        out_specs=out_specs,
        cost_estimate=pl.CostEstimate(
            flops=int(flops), transcendentals=0, bytes_accessed=int(bytes_accessed)),
    )(*args)


# ----------------------------------------------------------------------------
# Kernels
# ----------------------------------------------------------------------------
def _conv1_kernel(w_ref, p_ref, b_ref, o_ref):
    # Transposed orientation: (32,192) @ (192, B*OH*OW) -> (32, B*OH*OW)
    # so the output store is lane-dense (>=128 lanes).
    y = jnp.dot(w_ref[...], p_ref[...], preferred_element_type=jnp.float32)
    o_ref[...] = jnp.maximum(y + b_ref[...], 0.0)


def _conv2_kernel(p_ref, w_ref, b_ref, o_ref):
    y = jnp.dot(p_ref[...], w_ref[...], preferred_element_type=jnp.float32)
    o_ref[...] = jnp.maximum(y + b_ref[...], 0.0)


def _trunk_kernel(p3_ref, w3_ref, b3_ref, fcw_ref, fcb_ref,
                  mapw_ref, mapb_ref,
                  pos_ref, pw1_ref, pb1_ref, pw2_ref, pb2_ref,
                  feat_ref, pos_out_ref):
    """Fused conv3 + NatureCNN fc + Map write-encoder + position MLP (VMEM-resident)."""
    bf = jnp.bfloat16
    # conv3: output spatial is 1x1, so im2col == pure reshape; plain matmul here.
    z3 = jnp.dot(p3_ref[...], w3_ref[...], preferred_element_type=jnp.float32)
    z3 = jnp.maximum(z3 + b3_ref[...], 0.0)                               # (N, 64)
    # NatureCNN final linear
    hc = jnp.dot(z3.astype(bf), fcw_ref[...], preferred_element_type=jnp.float32)
    hc = jnp.maximum(hc + fcb_ref[...], 0.0)                              # (N, 64)
    # Map write-encoder (hoisted out of the time loop: independent of state)
    ft = jnp.dot(hc.astype(bf), mapw_ref[...], preferred_element_type=jnp.float32)
    feat_ref[...] = jnp.maximum(ft + mapb_ref[...], 0.0)                  # (N, 32)
    # Position MLP (Linear-ReLU-Linear)
    ph = jnp.dot(pos_ref[...], pw1_ref[...], preferred_element_type=jnp.float32)
    ph = jnp.maximum(ph + pb1_ref[...], 0.0)
    po = jnp.dot(ph.astype(bf), pw2_ref[...], preferred_element_type=jnp.float32)
    pos_out_ref[...] = po + pb2_ref[...]                                  # (N, 64)


def _head_kernel(h_ref, w1_ref, b1_ref, w2_ref, b2_ref, o_ref):
    """Fused policy+value MLPs: lane-dense (N,128) hidden, packed (128,5) output."""
    h1 = jnp.dot(h_ref[...], w1_ref[...], preferred_element_type=jnp.float32)
    h1 = jnp.maximum(h1 + b1_ref[...], 0.0)                               # (N, 128)
    o = jnp.dot(h1.astype(jnp.bfloat16), w2_ref[...], preferred_element_type=jnp.float32)
    o_ref[...] = o + b2_ref[...]                                          # (N, 5)


# ----------------------------------------------------------------------------
# im2col glue (channels-last, XLA layout ops only; the matmuls run in Pallas)
# ----------------------------------------------------------------------------
def _conv1_patches_T(x):
    """x: (N,36,36,3) f32 -> (KH*KW*C, N*OH*OW)=(192, N*64) bf16, transposed layout."""
    n = x.shape[0]
    cols = []
    for i in range(8):
        for j in range(8):
            cols.append(x[:, i:i + 4 * 8:4, j:j + 4 * 8:4, :])            # (N,8,8,3)
    p = jnp.stack(cols, axis=0).reshape(8, 8, n, 8, 8, IMG_C)             # (kh,kw,N,oh,ow,C)
    p = p.transpose(0, 1, 5, 2, 3, 4).reshape(8 * 8 * IMG_C, n * 8 * 8)   # rows (kh,kw,C)
    return p.astype(jnp.bfloat16)


def _conv2_patches(y1T, n):
    """y1T: (32, N*8*8) conv1 output -> (N*3*3, 4*4*32)=(N*9, 512) bf16 patches."""
    y = y1T.reshape(32, n, 8, 8)                                          # (C,N,H,W)
    cols = []
    for i in range(4):
        for j in range(4):
            cols.append(y[:, :, i:i + 2 * 3:2, j:j + 2 * 3:2])            # (C,N,3,3)
    p = jnp.stack(cols, axis=0).reshape(4, 4, 32, n, 3, 3)                # (ki,kj,C,N,oh,ow)
    p = p.transpose(3, 4, 5, 0, 1, 2).reshape(n * 9, 4 * 4 * 32)          # rows (n,oh,ow)
    return p.astype(jnp.bfloat16)


# ----------------------------------------------------------------------------
# Full MapAgent forward
# ----------------------------------------------------------------------------
def map_agent_forward(params, obs_image, obs_position, state_list, done):
    n_rows = obs_image.shape[0]
    # preprocess_image: scale to [0,1]; stay channels-last (no NCHW transposes)
    x = obs_image.astype(jnp.float32) * (1.0 / 255.0)

    # --- conv1 (transposed orientation -> lane-dense output store) ---
    p1 = _conv1_patches_T(x)                                              # (192, N*64)
    y1 = _pallas_dense(
        _conv1_kernel, (params["c1_wT"], p1, params["c1_b"]),
        jax.ShapeDtypeStruct((32, n_rows * 64), jnp.float32),
        flops=2 * 32 * 192 * n_rows * 64)

    # --- conv2 ---
    p2 = _conv2_patches(y1, n_rows)                                       # (N*9, 512)
    y2 = _pallas_dense(
        _conv2_kernel, (p2, params["c2_w"], params["c2_b"]),
        jax.ShapeDtypeStruct((n_rows * 9, 64), jnp.float32),
        flops=2 * n_rows * 9 * 512 * 64)

    # --- fused trunk: conv3 + fc + map write-encoder + position MLP ---
    p3 = y2.reshape(n_rows, 9 * 64).astype(jnp.bfloat16)                  # conv3 im2col = reshape
    index = obs_position.astype(jnp.int32)
    pos_onehot = jnp.concatenate(
        [jax.nn.one_hot(index[:, 0], POSITION_DIMS[0], dtype=jnp.float32),
         jax.nn.one_hot(index[:, 1], POSITION_DIMS[1], dtype=jnp.float32)],
        axis=1).astype(jnp.bfloat16)                                      # (N, 16)
    feat_all, pos_all = _pallas_dense(
        _trunk_kernel,
        (p3, params["c3_w"], params["c3_b"], params["fc_w"], params["fc_b"],
         params["map_w"], params["map_b"],
         pos_onehot, params["pos_w1"], params["pos_b1"],
         params["pos_w2"], params["pos_b2"]),
        (jax.ShapeDtypeStruct((n_rows, MAP_FEATURES), jnp.float32),
         jax.ShapeDtypeStruct((n_rows, POS_NET_OUT), jnp.float32)),
        flops=2 * n_rows * (576 * 64 + 64 * 64 + 64 * 32 + 16 * 64 + 64 * 64))

    # --- recurrence: scatter-write + incremental pooled mean (XLA glue) ---
    # TODO(synk): Map read/write semantics reconstructed (write encoded features at
    #             (x, y), read = [written feature, global-mean-pool of the map]).
    state = state_list[0]
    batch_size = state.shape[0]
    T = n_rows // batch_size
    feat_r = feat_all.reshape(T, batch_size, MAP_FEATURES)
    done_r = done.reshape(T, batch_size)
    index_r = index.reshape(T, batch_size, 2)
    barange = jnp.arange(batch_size)
    n_cells = float(MAP_SHAPE[1] * MAP_SHAPE[2])
    st = state
    sum_state = jnp.sum(st, axis=(2, 3))                                  # (B, F) running sum
    pooled_steps = []
    for t in range(T):
        keep = (1.0 - done_r[t])[:, None]                                 # (B, 1)
        masked = keep[:, :, None, None] * st
        ix, iy = index_r[t, :, 0], index_r[t, :, 1]
        old_cell = masked[barange, :, ix, iy]                             # (B, F) overwritten cell
        st = masked.at[barange, :, ix, iy].set(feat_r[t])                 # map write
        sum_state = keep * sum_state - old_cell + feat_r[t]               # O(F) incremental pool
        pooled_steps.append(sum_state / n_cells)
    pooled_all = jnp.concatenate(pooled_steps, axis=0)                    # (N, F) time-major

    # --- fused policy + value head ---
    hidden_full = jnp.concatenate([feat_all, pooled_all, pos_all],
                                  axis=1).astype(jnp.bfloat16)            # (N, 128)
    out = _pallas_dense(
        _head_kernel,
        (hidden_full, params["head_w1"], params["head_b1"],
         params["head_w2"], params["head_b2"]),
        jax.ShapeDtypeStruct((n_rows, N_ACTIONS + 1), jnp.float32),
        flops=2 * n_rows * (HEAD_IN * 2 * MLP_HIDDEN + 2 * MLP_HIDDEN * (N_ACTIONS + 1)))
    logits = out[:, :N_ACTIONS]
    v = out[:, N_ACTIONS:N_ACTIONS + 1]
    probs = jax.nn.softmax(logits, axis=-1)                               # Categorical(logits).probs
    return logits, probs, v, [st]


# ----------------------------------------------------------------------------
# Deterministic parameter init (kernel-ready: reshaped / transposed / bf16 once)
# ----------------------------------------------------------------------------
def _init_linear(key, in_dim, out_dim, gain=1.0):
    w = gain * jax.random.normal(key, (in_dim, out_dim), jnp.float32) / jnp.sqrt(in_dim)
    b = jnp.zeros((out_dim,), jnp.float32)
    return w, b


def _init_conv(key, kh, kw, in_c, out_c):
    fan_in = in_c * kh * kw
    w = jax.random.normal(key, (kh, kw, in_c, out_c), jnp.float32) / jnp.sqrt(fan_in)
    b = jnp.zeros((out_c,), jnp.float32)
    return w, b


def init_params(key):
    # TODO(synk): NatureCNN architecture reconstructed (SB3 default 8/4, 4/2, 3/1 convs + linear);
    #             MLP reconstructed as Linear-ReLU-Linear with hidden=64.
    ks = jax.random.split(key, 11)
    c1w, c1b = _init_conv(ks[0], 8, 8, IMG_C, 32)
    c2w, c2b = _init_conv(ks[1], 4, 4, 32, 64)
    c3w, c3b = _init_conv(ks[2], 3, 3, 64, 64)
    fcw, fcb = _init_linear(ks[3], 64, CNN_FEATURES)
    mw, mb = _init_linear(ks[4], CNN_FEATURES, MAP_FEATURES)
    pw1, pb1 = _init_linear(ks[5], sum(POSITION_DIMS), MLP_HIDDEN)
    pw2, pb2 = _init_linear(ks[6], MLP_HIDDEN, POS_NET_OUT)
    pol_w1, pol_b1 = _init_linear(ks[7], HEAD_IN, MLP_HIDDEN)
    pol_w2, pol_b2 = _init_linear(ks[8], MLP_HIDDEN, N_ACTIONS, gain=0.01)
    val_w1, val_b1 = _init_linear(ks[9], HEAD_IN, MLP_HIDDEN)
    val_w2, val_b2 = _init_linear(ks[10], MLP_HIDDEN, 1, gain=1.0)

    bf = jnp.bfloat16
    # Fused policy+value head: concat first layers, pack second layers block-diagonally.
    head_w1 = jnp.concatenate([pol_w1, val_w1], axis=1)                   # (128, 128)
    head_b1 = jnp.concatenate([pol_b1, val_b1])                           # (128,)
    head_w2 = jnp.zeros((2 * MLP_HIDDEN, N_ACTIONS + 1), jnp.float32)
    head_w2 = head_w2.at[:MLP_HIDDEN, :N_ACTIONS].set(pol_w2)
    head_w2 = head_w2.at[MLP_HIDDEN:, N_ACTIONS:].set(val_w2)
    head_b2 = jnp.concatenate([pol_b2, val_b2])                           # (5,)

    return {
        "c1_wT": c1w.reshape(8 * 8 * IMG_C, 32).T.astype(bf),             # (32, 192)
        "c1_b": c1b.reshape(32, 1),
        "c2_w": c2w.reshape(4 * 4 * 32, 64).astype(bf),                   # (512, 64)
        "c2_b": c2b.reshape(1, 64),
        "c3_w": c3w.reshape(3 * 3 * 64, 64).astype(bf),                   # (576, 64)
        "c3_b": c3b.reshape(1, 64),
        "fc_w": fcw.astype(bf), "fc_b": fcb.reshape(1, -1),
        "map_w": mw.astype(bf), "map_b": mb.reshape(1, -1),
        "pos_w1": pw1.astype(bf), "pos_b1": pb1.reshape(1, -1),
        "pos_w2": pw2.astype(bf), "pos_b2": pb2.reshape(1, -1),
        "head_w1": head_w1.astype(bf), "head_b1": head_b1.reshape(1, -1),
        "head_w2": head_w2.astype(bf), "head_b2": head_b2.reshape(1, -1),
    }


# ----------------------------------------------------------------------------
if __name__ == "__main__":
    key = jax.random.PRNGKey(0)
    kp, ki, kpos = jax.random.split(key, 3)

    params = init_params(kp)

    obs_image = jax.random.randint(
        ki, (BATCH, IMG_H, IMG_W, IMG_C), 0, 256).astype(jnp.float32)
    obs_position = jnp.stack(
        [jax.random.randint(kpos, (BATCH,), 0, POSITION_DIMS[0]),
         jax.random.randint(jax.random.fold_in(kpos, 1), (BATCH,), 0, POSITION_DIMS[1])],
        axis=1,
    ).astype(jnp.int32)
    done = jnp.zeros((BATCH,), jnp.float32)
    # initial(): zeros((num_envs, *map_net.shape))
    state = [jnp.zeros((BATCH,) + MAP_SHAPE, jnp.float32)]

    fwd = jax.jit(map_agent_forward)
    logits, probs, value, new_state = fwd(params, obs_image, obs_position, state, done)
    jax.block_until_ready((logits, probs, value, new_state[0]))

    assert logits.shape == (BATCH, N_ACTIONS)
    assert probs.shape == (BATCH, N_ACTIONS)
    assert value.shape == (BATCH, 1)
    assert new_state[0].shape == (BATCH,) + MAP_SHAPE
    assert bool(jnp.all(jnp.isfinite(logits))) and bool(jnp.all(jnp.isfinite(value)))
    print("KERNEL_OK")
</pallas_src>

<mosaic_0001>
module attributes {stable_mosaic.version = 11 : i64} {
  func.func @_conv1_kernel(%arg0: memref<32x192xbf16, #tpu.memory_space<vmem>>, %arg1: memref<192x128xbf16, #tpu.memory_space<vmem>>, %arg2: memref<32x1xf32, #tpu.memory_space<vmem>>, %arg3: memref<32x128xf32, #tpu.memory_space<vmem>>) attributes {dimension_semantics = [], scalar_prefetch = 0 : i64, scratch_operands = 0 : i64, tpu.core_type = #tpu.core_type<tc>} {
    %c0 = arith.constant 0 : index
    %c0_0 = arith.constant 0 : index
    %0 = vector.load %arg0[%c0, %c0_0] : memref<32x192xbf16, #tpu.memory_space<vmem>>, vector<32x192xbf16>
    %c0_1 = arith.constant 0 : index
    %c0_2 = arith.constant 0 : index
    %1 = vector.load %arg1[%c0_1, %c0_2] : memref<192x128xbf16, #tpu.memory_space<vmem>>, vector<192x128xbf16>
    %cst = arith.constant dense<0.000000e+00> : vector<32x128xf32>
    %2 = tpu.matmul %0, %1, %cst {dimension_numbers = #tpu.dot_dimension_numbers<[1], [0], [0], [1], [0, 0, 1, 1], [], []>} : vector<32x192xbf16>, vector<192x128xbf16>, vector<32x128xf32> -> vector<32x128xf32>
    %c0_3 = arith.constant 0 : index
    %c0_4 = arith.constant 0 : index
    %3 = vector.load %arg2[%c0_3, %c0_4] : memref<32x1xf32, #tpu.memory_space<vmem>>, vector<32x1xf32>
    %4 = vector.broadcast %3 : vector<32x1xf32> to vector<32x128xf32>
    %5 = arith.addf %2, %4 : vector<32x128xf32>
    %cst_5 = arith.constant 0.000000e+00 : f32
    %6 = vector.broadcast %cst_5 : f32 to vector<32x128xf32>
    %7 = arith.maximumf %5, %6 : vector<32x128xf32>
    %c0_6 = arith.constant 0 : index
    %c0_7 = arith.constant 0 : index
    %8 = vector.load %arg3[%c0_6, %c0_7] : memref<32x128xf32, #tpu.memory_space<vmem>>, vector<32x128xf32>
    tpu.vector_store %arg3[%c0_6, %c0_7], %7 {strides = array<i32>} : memref<32x128xf32, #tpu.memory_space<vmem>>, vector<32x128xf32>,
    return
  }
}

module attributes {stable_mosaic.version = 11 : i64} {
  func.func @_conv2_kernel(%arg0: memref<18x512xbf16, #tpu.memory_space<vmem>>, %arg1: memref<512x64xbf16, #tpu.memory_space<vmem>>, %arg2: memref<1x64xf32, #tpu.memory_space<vmem>>, %arg3: memref<18x64xf32, #tpu.memory_space<vmem>>) attributes {dimension_semantics = [], scalar_prefetch = 0 : i64, scratch_operands = 0 : i64, tpu.core_type = #tpu.core_type<tc>} {
    %c0 = arith.constant 0 : index
    %c0_0 = arith.constant 0 : index
    %0 = vector.load %arg0[%c0, %c0_0] : memref<18x512xbf16, #tpu.memory_space<vmem>>, vector<18x512xbf16>
    %c0_1 = arith.constant 0 : index
    %c0_2 = arith.constant 0 : index
    %1 = vector.load %arg1[%c0_1, %c0_2] : memref<512x64xbf16, #tpu.memory_space<vmem>>, vector<512x64xbf16>
    %cst = arith.constant dense<0.000000e+00> : vector<18x64xf32>
    %2 = tpu.matmul %0, %1, %cst {dimension_numbers = #tpu.dot_dimension_numbers<[1], [0], [0], [1], [0, 0, 1, 1], [], []>} : vector<18x512xbf16>, vector<512x64xbf16>, vector<18x64xf32> -> vector<18x64xf32>
    %c0_3 = arith.constant 0 : index
    %c0_4 = arith.constant 0 : index
    %3 = vector.load %arg2[%c0_3, %c0_4] : memref<1x64xf32, #tpu.memory_space<vmem>>, vector<1x64xf32>
    %4 = vector.broadcast %3 : vector<1x64xf32> to vector<18x64xf32>
    %5 = arith.addf %2, %4 : vector<18x64xf32>
    %cst_5 = arith.constant 0.000000e+00 : f32
    %6 = vector.broadcast %cst_5 : f32 to vector<18x64xf32>
    %7 = arith.maximumf %5, %6 : vector<18x64xf32>
    %c0_6 = arith.constant 0 : index
    %c0_7 = arith.constant 0 : index
    %8 = vector.load %arg3[%c0_6, %c0_7] : memref<18x64xf32, #tpu.memory_space<vmem>>, vector<18x64xf32>
    tpu.vector_store %arg3[%c0_6, %c0_7], %7 {strides = array<i32>} : memref<18x64xf32, #tpu.memory_space<vmem>>, vector<18x64xf32>,
    return
  }
}

module attributes {stable_mosaic.version = 11 : i64} {
  func.func @_trunk_kernel(%arg0: memref<2x576xbf16, #tpu.memory_space<vmem>>, %arg1: memref<576x64xbf16, #tpu.memory_space<vmem>>, %arg2: memref<1x64xf32, #tpu.memory_space<vmem>>, %arg3: memref<64x64xbf16, #tpu.memory_space<vmem>>, %arg4: memref<1x64xf32, #tpu.memory_space<vmem>>, %arg5: memref<64x32xbf16, #tpu.memory_space<vmem>>, %arg6: memref<1x32xf32, #tpu.memory_space<vmem>>, %arg7: memref<2x16xbf16, #tpu.memory_space<vmem>>, %arg8: memref<16x64xbf16, #tpu.memory_space<vmem>>, %arg9: memref<1x64xf32, #tpu.memory_space<vmem>>, %arg10: memref<64x64xbf16, #tpu.memory_space<vmem>>, %arg11: memref<1x64xf32, #tpu.memory_space<vmem>>, %arg12: memref<2x32xf32, #tpu.memory_space<vmem>>, %arg13: memref<2x64xf32, #tpu.memory_space<vmem>>) attributes {dimension_semantics = [], scalar_prefetch = 0 : i64, scratch_operands = 0 : i64, tpu.core_type = #tpu.core_type<tc>} {
    %c0 = arith.constant 0 : index
    %c0_0 = arith.constant 0 : index
    %0 = vector.load %arg0[%c0, %c0_0] : memref<2x576xbf16, #tpu.memory_space<vmem>>, vector<2x576xbf16>
    %c0_1 = arith.constant 0 : index
    %c0_2 = arith.constant 0 : index
    %1 = vector.load %arg1[%c0_1, %c0_2] : memref<576x64xbf16, #tpu.memory_space<vmem>>, vector<576x64xbf16>
    %cst = arith.constant dense<0.000000e+00> : vector<2x64xf32>
    %2 = tpu.matmul %0, %1, %cst {dimension_numbers = #tpu.dot_dimension_numbers<[1], [0], [0], [1], [0, 0, 1, 1], [], []>} : vector<2x576xbf16>, vector<576x64xbf16>, vector<2x64xf32> -> vector<2x64xf32>
    %c0_3 = arith.constant 0 : index
    %c0_4 = arith.constant 0 : index
    %3 = vector.load %arg2[%c0_3, %c0_4] : memref<1x64xf32, #tpu.memory_space<vmem>>, vector<1x64xf32>
    %4 = vector.broadcast %3 : vector<1x64xf32> to vector<2x64xf32>
    %5 = arith.addf %2, %4 : vector<2x64xf32>
    %cst_5 = arith.constant 0.000000e+00 : f32
    %6 = vector.broadcast %cst_5 : f32 to vector<2x64xf32>
    %7 = arith.maximumf %5, %6 : vector<2x64xf32>
    %8 = arith.truncf %7 : vector<2x64xf32> to vector<2x64xbf16>
    %c0_6 = arith.constant 0 : index
    %c0_7 = arith.constant 0 : index
    %9 = vector.load %arg3[%c0_6, %c0_7] : memref<64x64xbf16, #tpu.memory_space<vmem>>, vector<64x64xbf16>
    %cst_8 = arith.constant dense<0.000000e+00> : vector<2x64xf32>
    %10 = tpu.matmul %8, %9, %cst_8 {dimension_numbers = #tpu.dot_dimension_numbers<[1], [0], [0], [1], [0, 0, 1, 1], [], []>} : vector<2x64xbf16>, vector<64x64xbf16>, vector<2x64xf32> -> vector<2x64xf32>
    %c0_9 = arith.constant 0 : index
    %c0_10 = arith.constant 0 : index
    %11 = vector.load %arg4[%c0_9, %c0_10] : memref<1x64xf32, #tpu.memory_space<vmem>>, vector<1x64xf32>
    %12 = vector.broadcast %11 : vector<1x64xf32> to vector<2x64xf32>
    %13 = arith.addf %10, %12 : vector<2x64xf32>
    %cst_11 = arith.constant 0.000000e+00 : f32
    %14 = vector.broadcast %cst_11 : f32 to vector<2x64xf32>
    %15 = arith.maximumf %13, %14 : vector<2x64xf32>
    %16 = arith.truncf %15 : vector<2x64xf32> to vector<2x64xbf16>
    %c0_12 = arith.constant 0 : index
    %c0_13 = arith.constant 0 : index
    %17 = vector.load %arg5[%c0_12, %c0_13] : memref<64x32xbf16, #tpu.memory_space<vmem>>, vector<64x32xbf16>
    %cst_14 = arith.constant dense<0.000000e+00> : vector<2x32xf32>
    %18 = tpu.matmul %16, %17, %cst_14 {dimension_numbers = #tpu.dot_dimension_numbers<[1], [0], [0], [1], [0, 0, 1, 1], [], []>} : vector<2x64xbf16>, vector<64x32xbf16>, vector<2x32xf32> -> vector<2x32xf32>
    %c0_15 = arith.constant 0 : index
    %c0_16 = arith.constant 0 : index
    %19 = vector.load %arg6[%c0_15, %c0_16] : memref<1x32xf32, #tpu.memory_space<vmem>>, vector<1x32xf32>
    %20 = vector.broadcast %19 : vector<1x32xf32> to vector<2x32xf32>
    %21 = arith.addf %18, %20 : vector<2x32xf32>
    %cst_17 = arith.constant 0.000000e+00 : f32
    %22 = vector.broadcast %cst_17 : f32 to vector<2x32xf32>
    %23 = arith.maximumf %21, %22 : vector<2x32xf32>
    %c0_18 = arith.constant 0 : index
    %c0_19 = arith.constant 0 : index
    %24 = vector.load %arg12[%c0_18, %c0_19] : memref<2x32xf32, #tpu.memory_space<vmem>>, vector<2x32xf32>
    tpu.vector_store %arg12[%c0_18, %c0_19], %23 {strides = array<i32>} : memref<2x32xf32, #tpu.memory_space<vmem>>, vector<2x32xf32>,
    %c0_20 = arith.constant 0 : index
    %c0_21 = arith.constant 0 : index
    %25 = vector.load %arg7[%c0_20, %c0_21] : memref<2x16xbf16, #tpu.memory_space<vmem>>, vector<2x16xbf16>
    %c0_22 = arith.constant 0 : index
    %c0_23 = arith.constant 0 : index
    %26 = vector.load %arg8[%c0_22, %c0_23] : memref<16x64xbf16, #tpu.memory_space<vmem>>, vector<16x64xbf16>
    %cst_24 = arith.constant dense<0.000000e+00> : vector<2x64xf32>
    %27 = tpu.matmul %25, %26, %cst_24 {dimension_numbers = #tpu.dot_dimension_numbers<[1], [0], [0], [1], [0, 0, 1, 1], [], []>} : vector<2x16xbf16>, vector<16x64xbf16>, vector<2x64xf32> -> vector<2x64xf32>
    %c0_25 = arith.constant 0 : index
    %c0_26 = arith.constant 0 : index
    %28 = vector.load %arg9[%c0_25, %c0_26] : memref<1x64xf32, #tpu.memory_space<vmem>>, vector<1x64xf32>
    %29 = vector.broadcast %28 : vector<1x64xf32> to vector<2x64xf32>
    %30 = arith.addf %27, %29 : vector<2x64xf32>
    %cst_27 = arith.constant 0.000000e+00 : f32
    %31 = vector.broadcast %cst_27 : f32 to vector<2x64xf32>
    %32 = arith.maximumf %30, %31 : vector<2x64xf32>
    %33 = arith.truncf %32 : vector<2x64xf32> to vector<2x64xbf16>
    %c0_28 = arith.constant 0 : index
    %c0_29 = arith.constant 0 : index
    %34 = vector.load %arg10[%c0_28, %c0_29] : memref<64x64xbf16, #tpu.memory_space<vmem>>, vector<64x64xbf16>
    %cst_30 = arith.constant dense<0.000000e+00> : vector<2x64xf32>
    %35 = tpu.matmul %33, %34, %cst_30 {dimension_numbers = #tpu.dot_dimension_numbers<[1], [0], [0], [1], [0, 0, 1, 1], [], []>} : vector<2x64xbf16>, vector<64x64xbf16>, vector<2x64xf32> -> vector<2x64xf32>
    %c0_31 = arith.constant 0 : index
    %c0_32 = arith.constant 0 : index
    %36 = vector.load %arg11[%c0_31, %c0_32] : memref<1x64xf32, #tpu.memory_space<vmem>>, vector<1x64xf32>
    %37 = vector.broadcast %36 : vector<1x64xf32> to vector<2x64xf32>
    %38 = arith.addf %35, %37 : vector<2x64xf32>
    %c0_33 = arith.constant 0 : index
    %c0_34 = arith.constant 0 : index
    %39 = vector.load %arg13[%c0_33, %c0_34] : memref<2x64xf32, #tpu.memory_space<vmem>>, vector<2x64xf32>
    tpu.vector_store %arg13[%c0_33, %c0_34], %38 {strides = array<i32>} : memref<2x64xf32, #tpu.memory_space<vmem>>, vector<2x64xf32>,
    return
  }
}

module attributes {stable_mosaic.version = 11 : i64} {
  func.func @_head_kernel(%arg0: memref<2x128xbf16, #tpu.memory_space<vmem>>, %arg1: memref<128x128xbf16, #tpu.memory_space<vmem>>, %arg2: memref<1x128xf32, #tpu.memory_space<vmem>>, %arg3: memref<128x5xbf16, #tpu.memory_space<vmem>>, %arg4: memref<1x5xf32, #tpu.memory_space<vmem>>, %arg5: memref<2x5xf32, #tpu.memory_space<vmem>>) attributes {dimension_semantics = [], scalar_prefetch = 0 : i64, scratch_operands = 0 : i64, tpu.core_type = #tpu.core_type<tc>} {
    %c0 = arith.constant 0 : index
    %c0_0 = arith.constant 0 : index
    %0 = vector.load %arg0[%c0, %c0_0] : memref<2x128xbf16, #tpu.memory_space<vmem>>, vector<2x128xbf16>
    %c0_1 = arith.constant 0 : index
    %c0_2 = arith.constant 0 : index
    %1 = vector.load %arg1[%c0_1, %c0_2] : memref<128x128xbf16, #tpu.memory_space<vmem>>, vector<128x128xbf16>
    %cst = arith.constant dense<0.000000e+00> : vector<2x128xf32>
    %2 = tpu.matmul %0, %1, %cst {dimension_numbers = #tpu.dot_dimension_numbers<[1], [0], [0], [1], [0, 0, 1, 1], [], []>} : vector<2x128xbf16>, vector<128x128xbf16>, vector<2x128xf32> -> vector<2x128xf32>
    %c0_3 = arith.constant 0 : index
    %c0_4 = arith.constant 0 : index
    %3 = vector.load %arg2[%c0_3, %c0_4] : memref<1x128xf32, #tpu.memory_space<vmem>>, vector<1x128xf32>
    %4 = vector.broadcast %3 : vector<1x128xf32> to vector<2x128xf32>
    %5 = arith.addf %2, %4 : vector<2x128xf32>
    %cst_5 = arith.constant 0.000000e+00 : f32
    %6 = vector.broadcast %cst_5 : f32 to vector<2x128xf32>
    %7 = arith.maximumf %5, %6 : vector<2x128xf32>
    %8 = arith.truncf %7 : vector<2x128xf32> to vector<2x128xbf16>
    %c0_6 = arith.constant 0 : index
    %c0_7 = arith.constant 0 : index
    %9 = vector.load %arg3[%c0_6, %c0_7] : memref<128x5xbf16, #tpu.memory_space<vmem>>, vector<128x5xbf16>
    %cst_8 = arith.constant dense<0.000000e+00> : vector<2x5xf32>
    %10 = tpu.matmul %8, %9, %cst_8 {dimension_numbers = #tpu.dot_dimension_numbers<[1], [0], [0], [1], [0, 0, 1, 1], [], []>} : vector<2x128xbf16>, vector<128x5xbf16>, vector<2x5xf32> -> vector<2x5xf32>
    %c0_9 = arith.constant 0 : index
    %c0_10 = arith.constant 0 : index
    %11 = vector.load %arg4[%c0_9, %c0_10] : memref<1x5xf32, #tpu.memory_space<vmem>>, vector<1x5xf32>
    %12 = vector.broadcast %11 : vector<1x5xf32> to vector<2x5xf32>
    %13 = arith.addf %10, %12 : vector<2x5xf32>
    %c0_11 = arith.constant 0 : index
    %c0_12 = arith.constant 0 : index
    %14 = vector.load %arg5[%c0_11, %c0_12] : memref<2x5xf32, #tpu.memory_space<vmem>>, vector<2x5xf32>
    tpu.vector_store %arg5[%c0_11, %c0_12], %13 {strides = array<i32>} : memref<2x5xf32, #tpu.memory_space<vmem>>, vector<2x5xf32>,
    return
  }
}

</mosaic_0001>

<llo_original>
// kernel: map_agent_forward.4
$region0: #{map_agent_forward.4}
  #allocation0 [shape = 'u32[]', space=smem, size = 0x4, offset = 0x4, fixed_abs, tag = 'smem constant byte address 0x4 - core index']
  #allocation1 [shape = 'u32[72,128]{1,0:T(1,128)}', space=vmem, size = 0x9000, scoped, tag = 'internal scratch']
  %s0 = inlined_call_operand.vmem [shape: bf16[32,192], index: 0, kind: input, shape index: {}]
  %s1 = inlined_call_operand.vmem [shape: bf16[192,128], index: 1, kind: input, shape index: {}]
  %s2 = inlined_call_operand.vmem [shape: f32[32,1], index: 2, kind: input, shape index: {}]
  %s3 = inlined_call_operand.vmem [shape: f32[32,128], index: 3, kind: output, shape index: {}]
  %s4 = sld [smem:[#allocation0]]
  $region22: #{map_agent_forward.4} parent=0
    _
  %s6 = ssub.s32 1, %s4
  %s7 = scalar_select 0, %s6, %s4
  // Predicated region
  $region2: #{map_agent_forward.4} parent=0 // pred_check
    _
  $region3: #{map_agent_forward.4} parent=0 // pred_check_branch
    %9 = sbr.rel (0) target = $region5
  $region4: #{map_agent_forward.4} parent=0 // pred_region
    _
  $region5: #{map_agent_forward.4} parent=0 // pred_fallthru
    _
  // Predicated region
  $region6: #{map_agent_forward.4} parent=0 // pred_check
    _
  $region7: #{map_agent_forward.4} parent=0 // pred_check_branch
    %11 = sbr.rel (0) target = $region9
  $region8: #{map_agent_forward.4} parent=0 // pred_region
    _
  $region9: #{map_agent_forward.4} parent=0 // pred_fallthru
    _
  // Predicated region
  $region10: #{map_agent_forward.4} parent=0 // pred_check
    _
  $region11: #{map_agent_forward.4} parent=0 // pred_check_branch
    %13 = sbr.rel (0) target = $region13
  $region12: #{map_agent_forward.4} parent=0 // pred_region
    _
  $region13: #{map_agent_forward.4} parent=0 // pred_fallthru
    _
  %v15 = vld [vmem:[%s0] sm:$0xff]
  %v16 = vld [vmem:[%s0 + $0x8] sm:$0xff]
  %v17 = vld [vmem:[%s0 + $0x10] sm:$0xff]
  %v18 = vld [vmem:[%s0 + $0x18] sm:$0xff]
  %v19 = vld [vmem:[%s1] sm:$0xf]
  %v20 = vld [vmem:[%s1 + $0x4] sm:$0xf]
  %v21 = vld [vmem:[%s1 + $0x8] sm:$0xf]
  %v22 = vld [vmem:[%s1 + $0xc] sm:$0xf]
  %v23 = vld [vmem:[%s1 + $0x10] sm:$0xf]
  %v24 = vld [vmem:[%s1 + $0x14] sm:$0xf]
  %v25 = vld [vmem:[%s1 + $0x18] sm:$0xf]
  %v26 = vld [vmem:[%s1 + $0x1c] sm:$0xf]
  %v27 = vld [vmem:[%s1 + $0x20] sm:$0xf]
  %v28 = vld [vmem:[%s1 + $0x24] sm:$0xf]
  %v29 = vld [vmem:[%s1 + $0x28] sm:$0xf]
  %v30 = vld [vmem:[%s1 + $0x2c] sm:$0xf]
  %v31 = vld [vmem:[%s1 + $0x30] sm:$0xf]
  %v32 = vld [vmem:[%s1 + $0x34] sm:$0xf]
  %v33 = vld [vmem:[%s1 + $0x38] sm:$0xf]
  %v34 = vld [vmem:[%s1 + $0x3c] sm:$0xf]
  %v35 = vld [vmem:[%s1 + $0x40] sm:$0xf]
  %v36 = vld [vmem:[%s1 + $0x44] sm:$0xf]
  %v37 = vld [vmem:[%s1 + $0x48] sm:$0xf]
  %v38 = vld [vmem:[%s1 + $0x4c] sm:$0xf]
  %v39 = vld [vmem:[%s1 + $0x50] sm:$0xf]
  %v40 = vld [vmem:[%s1 + $0x54] sm:$0xf]
  %v41 = vld [vmem:[%s1 + $0x58] sm:$0xf]
  %v42 = vld [vmem:[%s1 + $0x5c] sm:$0xf]
  %v43 = vld [vmem:[%s2] sm:$0xff]
  %v44 = vld [vmem:[%s2 + $0x8] sm:$0xff]
  %v45 = vld [vmem:[%s2 + $0x10] sm:$0xff]
  %v46 = vld [vmem:[%s2 + $0x18] sm:$0xff]
  %48 = vset.pattern.permute.xlu0 0
  %49 = vperm.xlu0 %48, %v43
  %v50 = vpop.permute.xlu0 %49
  %53 = vset.pattern.permute.xlu0 0
  %54 = vperm.xlu0 %53, %v44
  %v55 = vpop.permute.xlu0 %54
  %58 = vset.pattern.permute.xlu0 0
  %59 = vperm.xlu0 %58, %v45
  %v60 = vpop.permute.xlu0 %59
  %63 = vset.pattern.permute.xlu0 0
  %64 = vperm.xlu0 %63, %v46
  %v65 = vpop.permute.xlu0 %64
  %v71 = vunpack.c.l.b16 %v15
  %v72 = vunpack.c.h.b16 %v15
  %v73 = vunpack.c.l.b16 %v16
  %v74 = vunpack.c.h.b16 %v16
  %v75 = vunpack.c.l.b16 %v17
  %v76 = vunpack.c.h.b16 %v17
  %v77 = vunpack.c.l.b16 %v18
  %v78 = vunpack.c.h.b16 %v18
  %v79 = vpack.c.b16 %v73, %v71
  %v80 = vpack.c.b16 %v74, %v72
  %v81 = vpack.c.b16 %v77, %v75
  %v82 = vpack.c.b16 %v78, %v76
  %v109 = vunpack.c.l.b16 %v19
  %v110 = vunpack.c.l.b16 %v20
  %v111 = vunpack.c.l.b16 %v21
  %v112 = vunpack.c.l.b16 %v22
  %v113 = vunpack.c.l.b16 %v23
  %v114 = vunpack.c.l.b16 %v24
  %v115 = vunpack.c.l.b16 %v25
  %v116 = vunpack.c.l.b16 %v26
  %v117 = vunpack.c.l.b16 %v27
  %v118 = vunpack.c.l.b16 %v28
  %v119 = vunpack.c.l.b16 %v29
  %v120 = vunpack.c.l.b16 %v30
  %v121 = vunpack.c.l.b16 %v31
  %v122 = vunpack.c.l.b16 %v32
  %v123 = vunpack.c.l.b16 %v33
  %v124 = vunpack.c.l.b16 %v34
  %v125 = vunpack.c.l.b16 %v35
  %v126 = vunpack.c.l.b16 %v36
  %v127 = vunpack.c.l.b16 %v37
  %v128 = vunpack.c.l.b16 %v38
  %v129 = vunpack.c.l.b16 %v39
  %v130 = vunpack.c.l.b16 %v40
  %v131 = vunpack.c.l.b16 %v41
  %v132 = vunpack.c.l.b16 %v42
  %v133 = vpack.c.b16 %v110, %v109
  %v134 = vpack.c.b16 %v112, %v111
  %v135 = vpack.c.b16 %v114, %v113
  %v136 = vpack.c.b16 %v116, %v115
  %v137 = vpack.c.b16 %v118, %v117
  %v138 = vpack.c.b16 %v120, %v119
  %v139 = vpack.c.b16 %v122, %v121
  %v140 = vpack.c.b16 %v124, %v123
  %v141 = vpack.c.b16 %v126, %v125
  %v142 = vpack.c.b16 %v128, %v127
  %v143 = vpack.c.b16 %v130, %v129
  %v144 = vpack.c.b16 %v132, %v131
  %vm157 = vcmask 523264
  %v159 = vsel %vm157, %v80, 0
  %v162 = vsel %vm157, %v82, 0
  %164 = vmatpush.bf16.msra.mxu0 %v140
  %165 = vmatpush.bf16.msra.mxu0 %v139
  %166 = vmatpush.bf16.msra.mxu0 %v138
  %167 = vmatpush.bf16.msra.mxu0 %v137
  %168 = vmatpush.bf16.msra.mxu0 %v136
  %169 = vmatpush.bf16.msra.mxu0 %v135
  %170 = vmatpush.bf16.msra.mxu0 %v134
  %171 = vmatpush.bf16.msra.mxu0 %v133
  %172 = vmatmul.bf16.gmra.mxu0 %v79
  %v173 = vpop.f32.mrf.mxu0
  %v174 = vadd.f32 %v50, %v173
  %v175 = vpop.f32.mrf.mxu0
  %v176 = vadd.f32 %v55, %v175
  %177 = vmatmul.bf16.gmra.mxu0 %v81
  %v178 = vpop.f32.mrf.mxu0
  %v179 = vadd.f32 %v60, %v178
  %v180 = vpop.f32.mrf.mxu0
  %v181 = vadd.f32 %v65, %v180
  %182 = vdwg.mxu0
  %183 = vmatpush.bf16.msra.mxu0 0
  %184 = vmatpush.bf16.msra.mxu0 0
  %185 = vmatpush.bf16.msra.mxu0 0
  %186 = vmatpush.bf16.msra.mxu0 0
  %187 = vmatpush.bf16.msra.mxu0 %v144
  %188 = vmatpush.bf16.msra.mxu0 %v143
  %189 = vmatpush.bf16.msra.mxu0 %v142
  %190 = vmatpush.bf16.msra.mxu0 %v141
  %191 = vmatmul.bf16.gmra.mxu0 %v159
  %v192 = vpop.f32.mrf.mxu0
  %v193 = vadd.f32 %v174, %v192
  %v194 = vpop.f32.mrf.mxu0
  %v195 = vadd.f32 %v176, %v194
  %196 = vmatmul.bf16.gmra.mxu0 %v162
  %v197 = vpop.f32.mrf.mxu0
  %v198 = vadd.f32 %v179, %v197
  %v199 = vpop.f32.mrf.mxu0
  %v200 = vadd.f32 %v181, %v199
  %201 = vdwg.mxu0
  %v202 = vmax.f32 %v193, 0.0
  %v203 = vmax.f32 %v195, 0.0
  %v204 = vmax.f32 %v198, 0.0
  %v205 = vmax.f32 %v200, 0.0
  %206 = vst [vmem:[%s3] sm:$0xff] %v202
  %207 = vst [vmem:[%s3 + $0x8] sm:$0xff] %v203
  %208 = vst [vmem:[%s3 + $0x10] sm:$0xff] %v204
  %209 = vst [vmem:[%s3 + $0x18] sm:$0xff] %v205
  // Predicated region
  $region14: #{map_agent_forward.4} parent=0 // pred_check
    _
  $region15: #{map_agent_forward.4} parent=0 // pred_check_branch
    %211 = sbr.rel (0) target = $region17
  $region16: #{map_agent_forward.4} parent=0 // pred_region
    _
  $region17: #{map_agent_forward.4} parent=0 // pred_fallthru
    _
  // Predicated region
  $region18: #{map_agent_forward.4} parent=0 // pred_check
    _
  $region19: #{map_agent_forward.4} parent=0 // pred_check_branch
    %213 = sbr.rel (0) target = $region21
  $region20: #{map_agent_forward.4} parent=0 // pred_region
    _
  $region21: #{map_agent_forward.4} parent=0 // pred_fallthru
    _

// kernel: map_agent_forward.5
$region0: #{map_agent_forward.5}
  #allocation0 [shape = 'u32[]', space=smem, size = 0x4, offset = 0x4, fixed_abs, tag = 'smem constant byte address 0x4 - core index']
  #allocation1 [shape = 'u32[72,128]{1,0:T(1,128)}', space=vmem, size = 0x9000, scoped, tag = 'internal scratch']
  %s0 = inlined_call_operand.vmem [shape: bf16[18,512], index: 0, kind: input, shape index: {}]
  %s1 = inlined_call_operand.vmem [shape: bf16[512,64], index: 1, kind: input, shape index: {}]
  %s2 = inlined_call_operand.vmem [shape: f32[1,64], index: 2, kind: input, shape index: {}]
  %s3 = inlined_call_operand.vmem [shape: f32[18,64], index: 3, kind: output, shape index: {}]
  %s4 = sld [smem:[#allocation0]]
  $region22: #{map_agent_forward.5} parent=0
    _
  %s6 = ssub.s32 1, %s4
  %s7 = scalar_select 0, %s6, %s4
  // Predicated region
  $region2: #{map_agent_forward.5} parent=0 // pred_check
    _
  $region3: #{map_agent_forward.5} parent=0 // pred_check_branch
    %9 = sbr.rel (0) target = $region5
  $region4: #{map_agent_forward.5} parent=0 // pred_region
    _
  $region5: #{map_agent_forward.5} parent=0 // pred_fallthru
    _
  // Predicated region
  $region6: #{map_agent_forward.5} parent=0 // pred_check
    _
  $region7: #{map_agent_forward.5} parent=0 // pred_check_branch
    %11 = sbr.rel (0) target = $region9
  $region8: #{map_agent_forward.5} parent=0 // pred_region
    _
  $region9: #{map_agent_forward.5} parent=0 // pred_fallthru
    _
  // Predicated region
  $region10: #{map_agent_forward.5} parent=0 // pred_check
    _
  $region11: #{map_agent_forward.5} parent=0 // pred_check_branch
    %13 = sbr.rel (0) target = $region13
  $region12: #{map_agent_forward.5} parent=0 // pred_region
    _
  $region13: #{map_agent_forward.5} parent=0 // pred_fallthru
    _
  %v14 = vld [vmem:[%s0] sm:$0xff]
  %v15 = vld [vmem:[%s0 + $0x8] sm:$0xff]
  %v16 = vld [vmem:[%s0 + $0x10] sm:$0xff]
  %v17 = vld [vmem:[%s0 + $0x18] sm:$0xff]
  %v18 = vld [vmem:[%s0 + $0x20] sm:$0x11]
  %v19 = vld [vmem:[%s0 + $0x28] sm:$0x11]
  %v20 = vld [vmem:[%s1] sm:$0xf]
  %v21 = vld [vmem:[%s1 + $0x4] sm:$0xf]
  %v22 = vld [vmem:[%s1 + $0x8] sm:$0xf]
  %v23 = vld [vmem:[%s1 + $0xc] sm:$0xf]
  %v24 = vld [vmem:[%s1 + $0x10] sm:$0xf]
  %v25 = vld [vmem:[%s1 + $0x14] sm:$0xf]
  %v26 = vld [vmem:[%s1 + $0x18] sm:$0xf]
  %v27 = vld [vmem:[%s1 + $0x1c] sm:$0xf]
  %v28 = vld [vmem:[%s1 + $0x20] sm:$0xf]
  %v29 = vld [vmem:[%s1 + $0x24] sm:$0xf]
  %v30 = vld [vmem:[%s1 + $0x28] sm:$0xf]
  %v31 = vld [vmem:[%s1 + $0x2c] sm:$0xf]
  %v32 = vld [vmem:[%s1 + $0x30] sm:$0xf]
  %v33 = vld [vmem:[%s1 + $0x34] sm:$0xf]
  %v34 = vld [vmem:[%s1 + $0x38] sm:$0xf]
  %v35 = vld [vmem:[%s1 + $0x3c] sm:$0xf]
  %v36 = vld [vmem:[%s1 + $0x40] sm:$0xf]
  %v37 = vld [vmem:[%s1 + $0x44] sm:$0xf]
  %v38 = vld [vmem:[%s1 + $0x48] sm:$0xf]
  %v39 = vld [vmem:[%s1 + $0x4c] sm:$0xf]
  %v40 = vld [vmem:[%s1 + $0x50] sm:$0xf]
  %v41 = vld [vmem:[%s1 + $0x54] sm:$0xf]
  %v42 = vld [vmem:[%s1 + $0x58] sm:$0xf]
  %v43 = vld [vmem:[%s1 + $0x5c] sm:$0xf]
  %v44 = vld [vmem:[%s1 + $0x60] sm:$0xf]
  %v45 = vld [vmem:[%s1 + $0x64] sm:$0xf]
  %v46 = vld [vmem:[%s1 + $0x68] sm:$0xf]
  %v47 = vld [vmem:[%s1 + $0x6c] sm:$0xf]
  %v48 = vld [vmem:[%s1 + $0x70] sm:$0xf]
  %v49 = vld [vmem:[%s1 + $0x74] sm:$0xf]
  %v50 = vld [vmem:[%s1 + $0x78] sm:$0xf]
  %v51 = vld [vmem:[%s1 + $0x7c] sm:$0xf]
  %v52 = vld [vmem:[%s1 + $0x80] sm:$0xf]
  %v53 = vld [vmem:[%s1 + $0x84] sm:$0xf]
  %v54 = vld [vmem:[%s1 + $0x88] sm:$0xf]
  %v55 = vld [vmem:[%s1 + $0x8c] sm:$0xf]
  %v56 = vld [vmem:[%s1 + $0x90] sm:$0xf]
  %v57 = vld [vmem:[%s1 + $0x94] sm:$0xf]
  %v58 = vld [vmem:[%s1 + $0x98] sm:$0xf]
  %v59 = vld [vmem:[%s1 + $0x9c] sm:$0xf]
  %v60 = vld [vmem:[%s1 + $0xa0] sm:$0xf]
  %v61 = vld [vmem:[%s1 + $0xa4] sm:$0xf]
  %v62 = vld [vmem:[%s1 + $0xa8] sm:$0xf]
  %v63 = vld [vmem:[%s1 + $0xac] sm:$0xf]
  %v64 = vld [vmem:[%s1 + $0xb0] sm:$0xf]
  %v65 = vld [vmem:[%s1 + $0xb4] sm:$0xf]
  %v66 = vld [vmem:[%s1 + $0xb8] sm:$0xf]
  %v67 = vld [vmem:[%s1 + $0xbc] sm:$0xf]
  %v68 = vld [vmem:[%s1 + $0xc0] sm:$0xf]
  %v69 = vld [vmem:[%s1 + $0xc4] sm:$0xf]
  %v70 = vld [vmem:[%s1 + $0xc8] sm:$0xf]
  %v71 = vld [vmem:[%s1 + $0xcc] sm:$0xf]
  %v72 = vld [vmem:[%s1 + $0xd0] sm:$0xf]
  %v73 = vld [vmem:[%s1 + $0xd4] sm:$0xf]
  %v74 = vld [vmem:[%s1 + $0xd8] sm:$0xf]
  %v75 = vld [vmem:[%s1 + $0xdc] sm:$0xf]
  %v76 = vld [vmem:[%s1 + $0xe0] sm:$0xf]
  %v77 = vld [vmem:[%s1 + $0xe4] sm:$0xf]
  %v78 = vld [vmem:[%s1 + $0xe8] sm:$0xf]
  %v79 = vld [vmem:[%s1 + $0xec] sm:$0xf]
  %v80 = vld [vmem:[%s1 + $0xf0] sm:$0xf]
  %v81 = vld [vmem:[%s1 + $0xf4] sm:$0xf]
  %v82 = vld [vmem:[%s1 + $0xf8] sm:$0xf]
  %v83 = vld [vmem:[%s1 + $0xfc] sm:$0xf]
  %v84 = vld [vmem:[%s2] sm:$0x1]
  %v86 = vperm.slane %v84, 0
  %v94 = vunpack.c.l.b16 %v14
  %v95 = vunpack.c.h.b16 %v14
  %v96 = vunpack.c.l.b16 %v15
  %v97 = vunpack.c.h.b16 %v15
  %v98 = vunpack.c.l.b16 %v16
  %v99 = vunpack.c.h.b16 %v16
  %v100 = vunpack.c.l.b16 %v17
  %v101 = vunpack.c.h.b16 %v17
  %v102 = vunpack.c.l.b16 %v18
  %v103 = vunpack.c.h.b16 %v18
  %v104 = vunpack.c.l.b16 %v19
  %v105 = vunpack.c.h.b16 %v19
  %v106 = vpack.c.b16 %v98, %v94
  %v107 = vpack.c.b16 %v99, %v95
  %v108 = vpack.c.b16 %v100, %v96
  %v109 = vpack.c.b16 %v101, %v97
  %v110 = vpack.c.b16 %v102, %v102
  %v111 = vpack.c.b16 %v103, %v103
  %v112 = vpack.c.b16 %v104, %v104
  %v113 = vpack.c.b16 %v105, %v105
  %v186 = vunpack.c.l.b16 %v20
  %v187 = vunpack.c.l.b16 %v21
  %v188 = vunpack.c.l.b16 %v22
  %v189 = vunpack.c.l.b16 %v23
  %v190 = vunpack.c.l.b16 %v24
  %v191 = vunpack.c.l.b16 %v25
  %v192 = vunpack.c.l.b16 %v26
  %v193 = vunpack.c.l.b16 %v27
  %v194 = vunpack.c.l.b16 %v28
  %v195 = vunpack.c.l.b16 %v29
  %v196 = vunpack.c.l.b16 %v30
  %v197 = vunpack.c.l.b16 %v31
  %v198 = vunpack.c.l.b16 %v32
  %v199 = vunpack.c.l.b16 %v33
  %v200 = vunpack.c.l.b16 %v34
  %v201 = vunpack.c.l.b16 %v35
  %v202 = vunpack.c.l.b16 %v36
  %v203 = vunpack.c.l.b16 %v37
  %v204 = vunpack.c.l.b16 %v38
  %v205 = vunpack.c.l.b16 %v39
  %v206 = vunpack.c.l.b16 %v40
  %v207 = vunpack.c.l.b16 %v41
  %v208 = vunpack.c.l.b16 %v42
  %v209 = vunpack.c.l.b16 %v43
  %v210 = vunpack.c.l.b16 %v44
  %v211 = vunpack.c.l.b16 %v45
  %v212 = vunpack.c.l.b16 %v46
  %v213 = vunpack.c.l.b16 %v47
  %v214 = vunpack.c.l.b16 %v48
  %v215 = vunpack.c.l.b16 %v49
  %v216 = vunpack.c.l.b16 %v50
  %v217 = vunpack.c.l.b16 %v51
  %v218 = vunpack.c.l.b16 %v52
  %v219 = vunpack.c.l.b16 %v53
  %v220 = vunpack.c.l.b16 %v54
  %v221 = vunpack.c.l.b16 %v55
  %v222 = vunpack.c.l.b16 %v56
  %v223 = vunpack.c.l.b16 %v57
  %v224 = vunpack.c.l.b16 %v58
  %v225 = vunpack.c.l.b16 %v59
  %v226 = vunpack.c.l.b16 %v60
  %v227 = vunpack.c.l.b16 %v61
  %v228 = vunpack.c.l.b16 %v62
  %v229 = vunpack.c.l.b16 %v63
  %v230 = vunpack.c.l.b16 %v64
  %v231 = vunpack.c.l.b16 %v65
  %v232 = vunpack.c.l.b16 %v66
  %v233 = vunpack.c.l.b16 %v67
  %v234 = vunpack.c.l.b16 %v68
  %v235 = vunpack.c.l.b16 %v69
  %v236 = vunpack.c.l.b16 %v70
  %v237 = vunpack.c.l.b16 %v71
  %v238 = vunpack.c.l.b16 %v72
  %v239 = vunpack.c.l.b16 %v73
  %v240 = vunpack.c.l.b16 %v74
  %v241 = vunpack.c.l.b16 %v75
  %v242 = vunpack.c.l.b16 %v76
  %v243 = vunpack.c.l.b16 %v77
  %v244 = vunpack.c.l.b16 %v78
  %v245 = vunpack.c.l.b16 %v79
  %v246 = vunpack.c.l.b16 %v80
  %v247 = vunpack.c.l.b16 %v81
  %v248 = vunpack.c.l.b16 %v82
  %v249 = vunpack.c.l.b16 %v83
  %v250 = vpack.c.b16 %v187, %v186
  %v251 = vpack.c.b16 %v189, %v188
  %v252 = vpack.c.b16 %v191, %v190
  %v253 = vpack.c.b16 %v193, %v192
  %v254 = vpack.c.b16 %v195, %v194
  %v255 = vpack.c.b16 %v197, %v196
  %v256 = vpack.c.b16 %v199, %v198
  %v257 = vpack.c.b16 %v201, %v200
  %v258 = vpack.c.b16 %v203, %v202
  %v259 = vpack.c.b16 %v205, %v204
  %v260 = vpack.c.b16 %v207, %v206
  %v261 = vpack.c.b16 %v209, %v208
  %v262 = vpack.c.b16 %v211, %v210
  %v263 = vpack.c.b16 %v213, %v212
  %v264 = vpack.c.b16 %v215, %v214
  %v265 = vpack.c.b16 %v217, %v216
  %v266 = vpack.c.b16 %v219, %v218
  %v267 = vpack.c.b16 %v221, %v220
  %v268 = vpack.c.b16 %v223, %v222
  %v269 = vpack.c.b16 %v225, %v224
  %v270 = vpack.c.b16 %v227, %v226
  %v271 = vpack.c.b16 %v229, %v228
  %v272 = vpack.c.b16 %v231, %v230
  %v273 = vpack.c.b16 %v233, %v232
  %v274 = vpack.c.b16 %v235, %v234
  %v275 = vpack.c.b16 %v237, %v236
  %v276 = vpack.c.b16 %v239, %v238
  %v277 = vpack.c.b16 %v241, %v240
  %v278 = vpack.c.b16 %v243, %v242
  %v279 = vpack.c.b16 %v245, %v244
  %v280 = vpack.c.b16 %v247, %v246
  %v281 = vpack.c.b16 %v249, %v248
  %314 = vmatpush.bf16.msra.mxu0 %v257
  %315 = vmatpush.bf16.msra.mxu0 %v256
  %316 = vmatpush.bf16.msra.mxu0 %v255
  %317 = vmatpush.bf16.msra.mxu0 %v254
  %318 = vmatpush.bf16.msra.mxu0 %v253
  %319 = vmatpush.bf16.msra.mxu0 %v252
  %320 = vmatpush.bf16.msra.mxu0 %v251
  %321 = vmatpush.bf16.msra.mxu0 %v250
  %322 = vmatmul.bf16.gmra.mxu0 %v106
  %v323 = vpop.f32.mrf.mxu0
  %v324 = vadd.f32 %v86, %v323
  %v325 = vpop.f32.mrf.mxu0
  %v326 = vadd.f32 %v86, %v325
  %327 = vmatmul.bf16.gmra.mxu0 %v110
  %v328 = vpop.f32.mrf.mxu0
  %v329 = vadd.f32 %v86, %v328
  %v330 = vpop.f32.mrf.mxu0
  %331 = vdwg.mxu0
  %332 = vmatpush.bf16.msra.mxu0 %v265
  %333 = vmatpush.bf16.msra.mxu0 %v264
  %334 = vmatpush.bf16.msra.mxu0 %v263
  %335 = vmatpush.bf16.msra.mxu0 %v262
  %336 = vmatpush.bf16.msra.mxu0 %v261
  %337 = vmatpush.bf16.msra.mxu0 %v260
  %338 = vmatpush.bf16.msra.mxu0 %v259
  %339 = vmatpush.bf16.msra.mxu0 %v258
  %340 = vmatmul.bf16.gmra.mxu0 %v107
  %v341 = vpop.f32.mrf.mxu0
  %v342 = vadd.f32 %v324, %v341
  %v343 = vpop.f32.mrf.mxu0
  %v344 = vadd.f32 %v326, %v343
  %345 = vmatmul.bf16.gmra.mxu0 %v111
  %v346 = vpop.f32.mrf.mxu0
  %v347 = vadd.f32 %v329, %v346
  %v348 = vpop.f32.mrf.mxu0
  %349 = vdwg.mxu0
  %350 = vmatpush.bf16.msra.mxu0 %v273
  %351 = vmatpush.bf16.msra.mxu0 %v272
  %352 = vmatpush.bf16.msra.mxu0 %v271
  %353 = vmatpush.bf16.msra.mxu0 %v270
  %354 = vmatpush.bf16.msra.mxu0 %v269
  %355 = vmatpush.bf16.msra.mxu0 %v268
  %356 = vmatpush.bf16.msra.mxu0 %v267
  %357 = vmatpush.bf16.msra.mxu0 %v266
  %358 = vmatmul.bf16.gmra.mxu0 %v108
  %v359 = vpop.f32.mrf.mxu0
  %v360 = vadd.f32 %v342, %v359
  %v361 = vpop.f32.mrf.mxu0
  %v362 = vadd.f32 %v344, %v361
  %363 = vmatmul.bf16.gmra.mxu0 %v112
  %v364 = vpop.f32.mrf.mxu0
  %v365 = vadd.f32 %v347, %v364
  %v366 = vpop.f32.mrf.mxu0
  %367 = vdwg.mxu0
  %368 = vmatpush.bf16.msra.mxu0 %v281
  %369 = vmatpush.bf16.msra.mxu0 %v280
  %370 = vmatpush.bf16.msra.mxu0 %v279
  %371 = vmatpush.bf16.msra.mxu0 %v278
  %372 = vmatpush.bf16.msra.mxu0 %v277
  %373 = vmatpush.bf16.msra.mxu0 %v276
  %374 = vmatpush.bf16.msra.mxu0 %v275
  %375 = vmatpush.bf16.msra.mxu0 %v274
  %376 = vmatmul.bf16.gmra.mxu0 %v109
  %v377 = vpop.f32.mrf.mxu0
  %v378 = vadd.f32 %v360, %v377
  %v379 = vpop.f32.mrf.mxu0
  %v380 = vadd.f32 %v362, %v379
  %381 = vmatmul.bf16.gmra.mxu0 %v113
  %v382 = vpop.f32.mrf.mxu0
  %v383 = vadd.f32 %v365, %v382
  %v384 = vpop.f32.mrf.mxu0
  %385 = vdwg.mxu0
  %v386 = vmax.f32 %v378, 0.0
  %v387 = vmax.f32 %v380, 0.0
  %v388 = vmax.f32 %v383, 0.0
  %vm389 = vcmask 523264
  %390 = vst.msk [vmem:[%s3] sm:$0xff] %vm389, %v386
  %391 = vst.msk [vmem:[%s3 + $0x8] sm:$0xff] %vm389, %v387
  %vm392 = vcmask 517120
  %393 = vst.msk [vmem:[%s3 + $0x10] sm:$0x3] %vm392, %v388
  // Predicated region
  $region14: #{map_agent_forward.5} parent=0 // pred_check
    _
  $region15: #{map_agent_forward.5} parent=0 // pred_check_branch
    %395 = sbr.rel (0) target = $region17
  $region16: #{map_agent_forward.5} parent=0 // pred_region
    _
  $region17: #{map_agent_forward.5} parent=0 // pred_fallthru
    _
  // Predicated region
  $region18: #{map_agent_forward.5} parent=0 // pred_check
    _
  $region19: #{map_agent_forward.5} parent=0 // pred_check_branch
    %397 = sbr.rel (0) target = $region21
  $region20: #{map_agent_forward.5} parent=0 // pred_region
    _
  $region21: #{map_agent_forward.5} parent=0 // pred_fallthru
    _

// kernel: map_agent_forward.6
$region0: #{map_agent_forward.6}
  #allocation0 [shape = 'u32[]', space=smem, size = 0x4, offset = 0x4, fixed_abs, tag = 'smem constant byte address 0x4 - core index']
  #allocation1 [shape = 'u32[72,128]{1,0:T(1,128)}', space=vmem, size = 0x9000, scoped, tag = 'internal scratch']
  %s0 = inlined_call_operand.vmem [shape: bf16[2,576], index: 0, kind: input, shape index: {}]
  %s1 = inlined_call_operand.vmem [shape: bf16[576,64], index: 1, kind: input, shape index: {}]
  %s2 = inlined_call_operand.vmem [shape: f32[1,64], index: 2, kind: input, shape index: {}]
  %s3 = inlined_call_operand.vmem [shape: bf16[64,64], index: 3, kind: input, shape index: {}]
  %s4 = inlined_call_operand.vmem [shape: f32[1,64], index: 4, kind: input, shape index: {}]
  %s5 = inlined_call_operand.vmem [shape: bf16[64,32], index: 5, kind: input, shape index: {}]
  %s6 = inlined_call_operand.vmem [shape: f32[1,32], index: 6, kind: input, shape index: {}]
  %s7 = inlined_call_operand.vmem [shape: bf16[2,16], index: 7, kind: input, shape index: {}]
  %s8 = inlined_call_operand.vmem [shape: bf16[16,64], index: 8, kind: input, shape index: {}]
  %s9 = inlined_call_operand.vmem [shape: f32[1,64], index: 9, kind: input, shape index: {}]
  %s10 = inlined_call_operand.vmem [shape: bf16[64,64], index: 10, kind: input, shape index: {}]
  %s11 = inlined_call_operand.vmem [shape: f32[1,64], index: 11, kind: input, shape index: {}]
  %s12 = inlined_call_operand.vmem [shape: f32[2,32], index: 12, kind: output, shape index: {0}]
  %s13 = inlined_call_operand.vmem [shape: f32[2,64], index: 13, kind: output, shape index: {1}]
  %14 = xla_tuple %s12, %s13
  %s15 = sld [smem:[#allocation0]]
  $region66: #{map_agent_forward.6} parent=0
    _
  %s17 = ssub.s32 1, %s15
  %s18 = scalar_select 0, %s17, %s15
  // Predicated region
  $region2: #{map_agent_forward.6} parent=0 // pred_check
    _
  $region3: #{map_agent_forward.6} parent=0 // pred_check_branch
    %20 = sbr.rel (0) target = $region5
  $region4: #{map_agent_forward.6} parent=0 // pred_region
    _
  $region5: #{map_agent_forward.6} parent=0 // pred_fallthru
    _
  // Predicated region
  $region6: #{map_agent_forward.6} parent=0 // pred_check
    _
  $region7: #{map_agent_forward.6} parent=0 // pred_check_branch
    %22 = sbr.rel (0) target = $region9
  $region8: #{map_agent_forward.6} parent=0 // pred_region
    _
  $region9: #{map_agent_forward.6} parent=0 // pred_fallthru
    _
  // Predicated region
  $region10: #{map_agent_forward.6} parent=0 // pred_check
    _
  $region11: #{map_agent_forward.6} parent=0 // pred_check_branch
    %24 = sbr.rel (0) target = $region13
  $region12: #{map_agent_forward.6} parent=0 // pred_region
    _
  $region13: #{map_agent_forward.6} parent=0 // pred_fallthru
    _
  // Predicated region
  $region14: #{map_agent_forward.6} parent=0 // pred_check
    _
  $region15: #{map_agent_forward.6} parent=0 // pred_check_branch
    %26 = sbr.rel (0) target = $region17
  $region16: #{map_agent_forward.6} parent=0 // pred_region
    _
  $region17: #{map_agent_forward.6} parent=0 // pred_fallthru
    _
  // Predicated region
  $region18: #{map_agent_forward.6} parent=0 // pred_check
    _
  $region19: #{map_agent_forward.6} parent=0 // pred_check_branch
    %28 = sbr.rel (0) target = $region21
  $region20: #{map_agent_forward.6} parent=0 // pred_region
    _
  $region21: #{map_agent_forward.6} parent=0 // pred_fallthru
    _
  // Predicated region
  $region22: #{map_agent_forward.6} parent=0 // pred_check
    _
  $region23: #{map_agent_forward.6} parent=0 // pred_check_branch
    %30 = sbr.rel (0) target = $region25
  $region24: #{map_agent_forward.6} parent=0 // pred_region
    _
  $region25: #{map_agent_forward.6} parent=0 // pred_fallthru
    _
  // Predicated region
  $region26: #{map_agent_forward.6} parent=0 // pred_check
    _
  $region27: #{map_agent_forward.6} parent=0 // pred_check_branch
    %32 = sbr.rel (0) target = $region29
  $region28: #{map_agent_forward.6} parent=0 // pred_region
    _
  $region29: #{map_agent_forward.6} parent=0 // pred_fallthru
    _
  // Predicated region
  $region30: #{map_agent_forward.6} parent=0 // pred_check
    _
  $region31: #{map_agent_forward.6} parent=0 // pred_check_branch
    %34 = sbr.rel (0) target = $region33
  $region32: #{map_agent_forward.6} parent=0 // pred_region
    _
  $region33: #{map_agent_forward.6} parent=0 // pred_fallthru
    _
  // Predicated region
  $region34: #{map_agent_forward.6} parent=0 // pred_check
    _
  $region35: #{map_agent_forward.6} parent=0 // pred_check_branch
    %36 = sbr.rel (0) target = $region37
  $region36: #{map_agent_forward.6} parent=0 // pred_region
    _
  $region37: #{map_agent_forward.6} parent=0 // pred_fallthru
    _
  // Predicated region
  $region38: #{map_agent_forward.6} parent=0 // pred_check
    _
  $region39: #{map_agent_forward.6} parent=0 // pred_check_branch
    %38 = sbr.rel (0) target = $region41
  $region40: #{map_agent_forward.6} parent=0 // pred_region
    _
  $region41: #{map_agent_forward.6} parent=0 // pred_fallthru
    _
  // Predicated region
  $region42: #{map_agent_forward.6} parent=0 // pred_check
    _
  $region43: #{map_agent_forward.6} parent=0 // pred_check_branch
    %40 = sbr.rel (0) target = $region45
  $region44: #{map_agent_forward.6} parent=0 // pred_region
    _
  $region45: #{map_agent_forward.6} parent=0 // pred_fallthru
    _
  // Predicated region
  $region46: #{map_agent_forward.6} parent=0 // pred_check
    _
  $region47: #{map_agent_forward.6} parent=0 // pred_check_branch
    %42 = sbr.rel (0) target = $region49
  $region48: #{map_agent_forward.6} parent=0 // pred_region
    _
  $region49: #{map_agent_forward.6} parent=0 // pred_fallthru
    _
  %v44 = vld [vmem:[%s0] sm:$0x1f]
  %v45 = vld [vmem:[%s1] sm:$0xf]
  %v46 = vld [vmem:[%s1 + $0x4] sm:$0xf]
  %v47 = vld [vmem:[%s1 + $0x8] sm:$0xf]
  %v48 = vld [vmem:[%s1 + $0xc] sm:$0xf]
  %v49 = vld [vmem:[%s1 + $0x10] sm:$0xf]
  %v50 = vld [vmem:[%s1 + $0x14] sm:$0xf]
  %v51 = vld [vmem:[%s1 + $0x18] sm:$0xf]
  %v52 = vld [vmem:[%s1 + $0x1c] sm:$0xf]
  %v53 = vld [vmem:[%s1 + $0x20] sm:$0xf]
  %v54 = vld [vmem:[%s1 + $0x24] sm:$0xf]
  %v55 = vld [vmem:[%s1 + $0x28] sm:$0xf]
  %v56 = vld [vmem:[%s1 + $0x2c] sm:$0xf]
  %v57 = vld [vmem:[%s1 + $0x30] sm:$0xf]
  %v58 = vld [vmem:[%s1 + $0x34] sm:$0xf]
  %v59 = vld [vmem:[%s1 + $0x38] sm:$0xf]
  %v60 = vld [vmem:[%s1 + $0x3c] sm:$0xf]
  %v61 = vld [vmem:[%s1 + $0x40] sm:$0xf]
  %v62 = vld [vmem:[%s1 + $0x44] sm:$0xf]
  %v63 = vld [vmem:[%s1 + $0x48] sm:$0xf]
  %v64 = vld [vmem:[%s1 + $0x4c] sm:$0xf]
  %v65 = vld [vmem:[%s1 + $0x50] sm:$0xf]
  %v66 = vld [vmem:[%s1 + $0x54] sm:$0xf]
  %v67 = vld [vmem:[%s1 + $0x58] sm:$0xf]
  %v68 = vld [vmem:[%s1 + $0x5c] sm:$0xf]
  %v69 = vld [vmem:[%s1 + $0x60] sm:$0xf]
  %v70 = vld [vmem:[%s1 + $0x64] sm:$0xf]
  %v71 = vld [vmem:[%s1 + $0x68] sm:$0xf]
  %v72 = vld [vmem:[%s1 + $0x6c] sm:$0xf]
  %v73 = vld [vmem:[%s1 + $0x70] sm:$0xf]
  %v74 = vld [vmem:[%s1 + $0x74] sm:$0xf]
  %v75 = vld [vmem:[%s1 + $0x78] sm:$0xf]
  %v76 = vld [vmem:[%s1 + $0x7c] sm:$0xf]
  %v77 = vld [vmem:[%s1 + $0x80] sm:$0xf]
  %v78 = vld [vmem:[%s1 + $0x84] sm:$0xf]
  %v79 = vld [vmem:[%s1 + $0x88] sm:$0xf]
  %v80 = vld [vmem:[%s1 + $0x8c] sm:$0xf]
  %v81 = vld [vmem:[%s1 + $0x90] sm:$0xf]
  %v82 = vld [vmem:[%s1 + $0x94] sm:$0xf]
  %v83 = vld [vmem:[%s1 + $0x98] sm:$0xf]
  %v84 = vld [vmem:[%s1 + $0x9c] sm:$0xf]
  %v85 = vld [vmem:[%s1 + $0xa0] sm:$0xf]
  %v86 = vld [vmem:[%s1 + $0xa4] sm:$0xf]
  %v87 = vld [vmem:[%s1 + $0xa8] sm:$0xf]
  %v88 = vld [vmem:[%s1 + $0xac] sm:$0xf]
  %v89 = vld [vmem:[%s1 + $0xb0] sm:$0xf]
  %v90 = vld [vmem:[%s1 + $0xb4] sm:$0xf]
  %v91 = vld [vmem:[%s1 + $0xb8] sm:$0xf]
  %v92 = vld [vmem:[%s1 + $0xbc] sm:$0xf]
  %v93 = vld [vmem:[%s1 + $0xc0] sm:$0xf]
  %v94 = vld [vmem:[%s1 + $0xc4] sm:$0xf]
  %v95 = vld [vmem:[%s1 + $0xc8] sm:$0xf]
  %v96 = vld [vmem:[%s1 + $0xcc] sm:$0xf]
  %v97 = vld [vmem:[%s1 + $0xd0] sm:$0xf]
  %v98 = vld [vmem:[%s1 + $0xd4] sm:$0xf]
  %v99 = vld [vmem:[%s1 + $0xd8] sm:$0xf]
  %v100 = vld [vmem:[%s1 + $0xdc] sm:$0xf]
  %v101 = vld [vmem:[%s1 + $0xe0] sm:$0xf]
  %v102 = vld [vmem:[%s1 + $0xe4] sm:$0xf]
  %v103 = vld [vmem:[%s1 + $0xe8] sm:$0xf]
  %v104 = vld [vmem:[%s1 + $0xec] sm:$0xf]
  %v105 = vld [vmem:[%s1 + $0xf0] sm:$0xf]
  %v106 = vld [vmem:[%s1 + $0xf4] sm:$0xf]
  %v107 = vld [vmem:[%s1 + $0xf8] sm:$0xf]
  %v108 = vld [vmem:[%s1 + $0xfc] sm:$0xf]
  %v109 = vld [vmem:[%s1 + $0x100] sm:$0xf]
  %v110 = vld [vmem:[%s1 + $0x104] sm:$0xf]
  %v111 = vld [vmem:[%s1 + $0x108] sm:$0xf]
  %v112 = vld [vmem:[%s1 + $0x10c] sm:$0xf]
  %v113 = vld [vmem:[%s1 + $0x110] sm:$0xf]
  %v114 = vld [vmem:[%s1 + $0x114] sm:$0xf]
  %v115 = vld [vmem:[%s1 + $0x118] sm:$0xf]
  %v116 = vld [vmem:[%s1 + $0x11c] sm:$0xf]
  %v117 = vld [vmem:[%s2] sm:$0x1]
  %v119 = vperm.slane %v117, 0
  %122 = vst [vmem:[#allocation1] ss:$9 sm:$0xff] %v44
  %v123 = vld [vmem:[#allocation1] sm:$0xff]
  %v124 = vld [vmem:[#allocation1 + $0x9] sm:$0xff]
  %v125 = vld [vmem:[#allocation1 + $0x12] sm:$0xff]
  %v126 = vld [vmem:[#allocation1 + $0x1b] sm:$0xff]
  %v127 = vld [vmem:[#allocation1 + $0x24] sm:$0xff]
  %v204 = vunpack.c.l.b16 %v45
  %v205 = vunpack.c.l.b16 %v46
  %v206 = vunpack.c.l.b16 %v47
  %v207 = vunpack.c.l.b16 %v48
  %v208 = vunpack.c.l.b16 %v49
  %v209 = vunpack.c.l.b16 %v50
  %v210 = vunpack.c.l.b16 %v51
  %v211 = vunpack.c.l.b16 %v52
  %v212 = vunpack.c.l.b16 %v53
  %v213 = vunpack.c.l.b16 %v54
  %v214 = vunpack.c.l.b16 %v55
  %v215 = vunpack.c.l.b16 %v56
  %v216 = vunpack.c.l.b16 %v57
  %v217 = vunpack.c.l.b16 %v58
  %v218 = vunpack.c.l.b16 %v59
  %v219 = vunpack.c.l.b16 %v60
  %v220 = vunpack.c.l.b16 %v61
  %v221 = vunpack.c.l.b16 %v62
  %v222 = vunpack.c.l.b16 %v63
  %v223 = vunpack.c.l.b16 %v64
  %v224 = vunpack.c.l.b16 %v65
  %v225 = vunpack.c.l.b16 %v66
  %v226 = vunpack.c.l.b16 %v67
  %v227 = vunpack.c.l.b16 %v68
  %v228 = vunpack.c.l.b16 %v69
  %v229 = vunpack.c.l.b16 %v70
  %v230 = vunpack.c.l.b16 %v71
  %v231 = vunpack.c.l.b16 %v72
  %v232 = vunpack.c.l.b16 %v73
  %v233 = vunpack.c.l.b16 %v74
  %v234 = vunpack.c.l.b16 %v75
  %v235 = vunpack.c.l.b16 %v76
  %v236 = vunpack.c.l.b16 %v77
  %v237 = vunpack.c.l.b16 %v78
  %v238 = vunpack.c.l.b16 %v79
  %v239 = vunpack.c.l.b16 %v80
  %v240 = vunpack.c.l.b16 %v81
  %v241 = vunpack.c.l.b16 %v82
  %v242 = vunpack.c.l.b16 %v83
  %v243 = vunpack.c.l.b16 %v84
  %v244 = vunpack.c.l.b16 %v85
  %v245 = vunpack.c.l.b16 %v86
  %v246 = vunpack.c.l.b16 %v87
  %v247 = vunpack.c.l.b16 %v88
  %v248 = vunpack.c.l.b16 %v89
  %v249 = vunpack.c.l.b16 %v90
  %v250 = vunpack.c.l.b16 %v91
  %v251 = vunpack.c.l.b16 %v92
  %v252 = vunpack.c.l.b16 %v93
  %v253 = vunpack.c.l.b16 %v94
  %v254 = vunpack.c.l.b16 %v95
  %v255 = vunpack.c.l.b16 %v96
  %v256 = vunpack.c.l.b16 %v97
  %v257 = vunpack.c.l.b16 %v98
  %v258 = vunpack.c.l.b16 %v99
  %v259 = vunpack.c.l.b16 %v100
  %v260 = vunpack.c.l.b16 %v101
  %v261 = vunpack.c.l.b16 %v102
  %v262 = vunpack.c.l.b16 %v103
  %v263 = vunpack.c.l.b16 %v104
  %v264 = vunpack.c.l.b16 %v105
  %v265 = vunpack.c.l.b16 %v106
  %v266 = vunpack.c.l.b16 %v107
  %v267 = vunpack.c.l.b16 %v108
  %v268 = vunpack.c.l.b16 %v109
  %v269 = vunpack.c.l.b16 %v110
  %v270 = vunpack.c.l.b16 %v111
  %v271 = vunpack.c.l.b16 %v112
  %v272 = vunpack.c.l.b16 %v113
  %v273 = vunpack.c.l.b16 %v114
  %v274 = vunpack.c.l.b16 %v115
  %v275 = vunpack.c.l.b16 %v116
  %v276 = vpack.c.b16 %v205, %v204
  %v277 = vpack.c.b16 %v207, %v206
  %v278 = vpack.c.b16 %v209, %v208
  %v279 = vpack.c.b16 %v211, %v210
  %v280 = vpack.c.b16 %v213, %v212
  %v281 = vpack.c.b16 %v215, %v214
  %v282 = vpack.c.b16 %v217, %v216
  %v283 = vpack.c.b16 %v219, %v218
  %v284 = vpack.c.b16 %v221, %v220
  %v285 = vpack.c.b16 %v223, %v222
  %v286 = vpack.c.b16 %v225, %v224
  %v287 = vpack.c.b16 %v227, %v226
  %v288 = vpack.c.b16 %v229, %v228
  %v289 = vpack.c.b16 %v231, %v230
  %v290 = vpack.c.b16 %v233, %v232
  %v291 = vpack.c.b16 %v235, %v234
  %v292 = vpack.c.b16 %v237, %v236
  %v293 = vpack.c.b16 %v239, %v238
  %v294 = vpack.c.b16 %v241, %v240
  %v295 = vpack.c.b16 %v243, %v242
  %v296 = vpack.c.b16 %v245, %v244
  %v297 = vpack.c.b16 %v247, %v246
  %v298 = vpack.c.b16 %v249, %v248
  %v299 = vpack.c.b16 %v251, %v250
  %v300 = vpack.c.b16 %v253, %v252
  %v301 = vpack.c.b16 %v255, %v254
  %v302 = vpack.c.b16 %v257, %v256
  %v303 = vpack.c.b16 %v259, %v258
  %v304 = vpack.c.b16 %v261, %v260
  %v305 = vpack.c.b16 %v263, %v262
  %v306 = vpack.c.b16 %v265, %v264
  %v307 = vpack.c.b16 %v267, %v266
  %v308 = vpack.c.b16 %v269, %v268
  %v309 = vpack.c.b16 %v271, %v270
  %v310 = vpack.c.b16 %v273, %v272
  %v311 = vpack.c.b16 %v275, %v274
  %vm348 = vcmask 523264
  %v349 = vsel %vm348, %v127, 0
  %351 = vmatpush.bf16.msra.mxu0 %v283
  %352 = vmatpush.bf16.msra.mxu0 %v282
  %353 = vmatpush.bf16.msra.mxu0 %v281
  %354 = vmatpush.bf16.msra.mxu0 %v280
  %355 = vmatpush.bf16.msra.mxu0 %v279
  %356 = vmatpush.bf16.msra.mxu0 %v278
  %357 = vmatpush.bf16.msra.mxu0 %v277
  %358 = vmatpush.bf16.msra.mxu0 %v276
  %359 = vmatmul.bf16.gmra.mxu0 %v123
  %v360 = vpop.f32.mrf.mxu0
  %v361 = vadd.f32 %v119, %v360
  %v362 = vpop.f32.mrf.mxu0
  %363 = vdwg.mxu0
  %364 = vmatpush.bf16.msra.mxu0 %v291
  %365 = vmatpush.bf16.msra.mxu0 %v290
  %366 = vmatpush.bf16.msra.mxu0 %v289
  %367 = vmatpush.bf16.msra.mxu0 %v288
  %368 = vmatpush.bf16.msra.mxu0 %v287
  %369 = vmatpush.bf16.msra.mxu0 %v286
  %370 = vmatpush.bf16.msra.mxu0 %v285
  %371 = vmatpush.bf16.msra.mxu0 %v284
  %372 = vmatmul.bf16.gmra.mxu0 %v124
  %v373 = vpop.f32.mrf.mxu0
  %v374 = vadd.f32 %v361, %v373
  %v375 = vpop.f32.mrf.mxu0
  %376 = vdwg.mxu0
  %377 = vmatpush.bf16.msra.mxu0 %v299
  %378 = vmatpush.bf16.msra.mxu0 %v298
  %379 = vmatpush.bf16.msra.mxu0 %v297
  %380 = vmatpush.bf16.msra.mxu0 %v296
  %381 = vmatpush.bf16.msra.mxu0 %v295
  %382 = vmatpush.bf16.msra.mxu0 %v294
  %383 = vmatpush.bf16.msra.mxu0 %v293
  %384 = vmatpush.bf16.msra.mxu0 %v292
  %385 = vmatmul.bf16.gmra.mxu0 %v125
  %v386 = vpop.f32.mrf.mxu0
  %v387 = vadd.f32 %v374, %v386
  %v388 = vpop.f32.mrf.mxu0
  %389 = vdwg.mxu0
  %390 = vmatpush.bf16.msra.mxu0 %v307
  %391 = vmatpush.bf16.msra.mxu0 %v306
  %392 = vmatpush.bf16.msra.mxu0 %v305
  %393 = vmatpush.bf16.msra.mxu0 %v304
  %394 = vmatpush.bf16.msra.mxu0 %v303
  %395 = vmatpush.bf16.msra.mxu0 %v302
  %396 = vmatpush.bf16.msra.mxu0 %v301
  %397 = vmatpush.bf16.msra.mxu0 %v300
  %398 = vmatmul.bf16.gmra.mxu0 %v126
  %v399 = vpop.f32.mrf.mxu0
  %v400 = vadd.f32 %v387, %v399
  %v401 = vpop.f32.mrf.mxu0
  %402 = vdwg.mxu0
  %403 = vmatpush.bf16.msra.mxu0 0
  %404 = vmatpush.bf16.msra.mxu0 0
  %405 = vmatpush.bf16.msra.mxu0 0
  %406 = vmatpush.bf16.msra.mxu0 0
  %407 = vmatpush.bf16.msra.mxu0 %v311
  %408 = vmatpush.bf16.msra.mxu0 %v310
  %409 = vmatpush.bf16.msra.mxu0 %v309
  %410 = vmatpush.bf16.msra.mxu0 %v308
  %411 = vmatmul.bf16.gmra.mxu0 %v349
  %v412 = vpop.f32.mrf.mxu0
  %v413 = vadd.f32 %v400, %v412
  %v414 = vpop.f32.mrf.mxu0
  %415 = vdwg.mxu0
  %v416 = vmax.f32 %v413, 0.0
  %v417 = vpack.c.bf16 %v416, %v416
  %v418 = vld [vmem:[%s3] sm:$0xf]
  %v419 = vld [vmem:[%s3 + $0x4] sm:$0xf]
  %v420 = vld [vmem:[%s3 + $0x8] sm:$0xf]
  %v421 = vld [vmem:[%s3 + $0xc] sm:$0xf]
  %v422 = vld [vmem:[%s3 + $0x10] sm:$0xf]
  %v423 = vld [vmem:[%s3 + $0x14] sm:$0xf]
  %v424 = vld [vmem:[%s3 + $0x18] sm:$0xf]
  %v425 = vld [vmem:[%s3 + $0x1c] sm:$0xf]
  %v426 = vld [vmem:[%s4] sm:$0x1]
  %v428 = vperm.slane %v426, 0
  %v438 = vunpack.c.l.b16 %v418
  %v439 = vunpack.c.l.b16 %v419
  %v440 = vunpack.c.l.b16 %v420
  %v441 = vunpack.c.l.b16 %v421
  %v442 = vunpack.c.l.b16 %v422
  %v443 = vunpack.c.l.b16 %v423
  %v444 = vunpack.c.l.b16 %v424
  %v445 = vunpack.c.l.b16 %v425
  %v446 = vpack.c.b16 %v439, %v438
  %v447 = vpack.c.b16 %v441, %v440
  %v448 = vpack.c.b16 %v443, %v442
  %v449 = vpack.c.b16 %v445, %v444
  %v455 = vsel %vm348, %v417, 0
  %457 = vmatpush.bf16.msra.mxu0 0
  %458 = vmatpush.bf16.msra.mxu0 0
  %459 = vmatpush.bf16.msra.mxu0 0
  %460 = vmatpush.bf16.msra.mxu0 0
  %461 = vmatpush.bf16.msra.mxu0 %v449
  %462 = vmatpush.bf16.msra.mxu0 %v448
  %463 = vmatpush.bf16.msra.mxu0 %v447
  %464 = vmatpush.bf16.msra.mxu0 %v446
  %465 = vmatmul.bf16.gmra.mxu0 %v455
  %v466 = vpop.f32.mrf.mxu0
  %v467 = vadd.f32 %v428, %v466
  %v468 = vpop.f32.mrf.mxu0
  %469 = vdwg.mxu0
  %v470 = vmax.f32 %v467, 0.0
  %v471 = vpack.c.bf16 %v470, %v470
  %v472 = vld [vmem:[%s5] sm:$0xf]
  %v473 = vld [vmem:[%s5 + $0x4] sm:$0xf]
  %v474 = vld [vmem:[%s5 + $0x8] sm:$0xf]
  %v475 = vld [vmem:[%s5 + $0xc] sm:$0xf]
  %v476 = vld [vmem:[%s5 + $0x10] sm:$0xf]
  %v477 = vld [vmem:[%s5 + $0x14] sm:$0xf]
  %v478 = vld [vmem:[%s5 + $0x18] sm:$0xf]
  %v479 = vld [vmem:[%s5 + $0x1c] sm:$0xf]
  %v480 = vld [vmem:[%s6] sm:$0x1]
  %v482 = vperm.slane %v480, 0
  %v492 = vunpack.c.l.b16 %v472
  %v493 = vunpack.c.l.b16 %v473
  %v494 = vunpack.c.l.b16 %v474
  %v495 = vunpack.c.l.b16 %v475
  %v496 = vunpack.c.l.b16 %v476
  %v497 = vunpack.c.l.b16 %v477
  %v498 = vunpack.c.l.b16 %v478
  %v499 = vunpack.c.l.b16 %v479
  %v500 = vpack.c.b16 %v493, %v492
  %v501 = vpack.c.b16 %v495, %v494
  %v502 = vpack.c.b16 %v497, %v496
  %v503 = vpack.c.b16 %v499, %v498
  %v509 = vsel %vm348, %v471, 0
  %511 = vmatpush.bf16.msra.mxu0 0
  %512 = vmatpush.bf16.msra.mxu0 0
  %513 = vmatpush.bf16.msra.mxu0 0
  %514 = vmatpush.bf16.msra.mxu0 0
  %515 = vmatpush.bf16.msra.mxu0 %v503
  %516 = vmatpush.bf16.msra.mxu0 %v502
  %517 = vmatpush.bf16.msra.mxu0 %v501
  %518 = vmatpush.bf16.msra.mxu0 %v500
  %519 = vmatmul.bf16.gmra.mxu0 %v509
  %v520 = vpop.f32.mrf.mxu0
  %v521 = vadd.f32 %v482, %v520
  %v522 = vpop.f32.mrf.mxu0
  %523 = vdwg.mxu0
  %v524 = vmax.f32 %v521, 0.0
  %vm525 = vcmask 254976
  %526 = vst.msk [vmem:[%s12] sm:$0x3] %vm525, %v524
  %v527 = vld [vmem:[%s7] sm:$0x1]
  %v528 = vld [vmem:[%s8] sm:$0xf]
  %v529 = vld [vmem:[%s8 + $0x4] sm:$0xf]
  %v530 = vld [vmem:[%s9] sm:$0x1]
  %v532 = vperm.slane %v530, 0
  %v536 = vunpack.c.l.b16 %v528
  %v537 = vunpack.c.l.b16 %v529
  %v538 = vpack.c.b16 %v537, %v536
  %vm540 = vcmask 130048
  %v542 = vsel %vm540, %v527, 0
  %544 = vmatpush.bf16.msra.mxu0 0
  %545 = vmatpush.bf16.msra.mxu0 0
  %546 = vmatpush.bf16.msra.mxu0 0
  %547 = vmatpush.bf16.msra.mxu0 0
  %548 = vmatpush.bf16.msra.mxu0 0
  %549 = vmatpush.bf16.msra.mxu0 0
  %550 = vmatpush.bf16.msra.mxu0 0
  %551 = vmatpush.bf16.msra.mxu0 %v538
  %552 = vmatmul.bf16.gmra.mxu0 %v542
  %v553 = vpop.f32.mrf.mxu0
  %v554 = vadd.f32 %v532, %v553
  %v555 = vpop.f32.mrf.mxu0
  %556 = vdwg.mxu0
  %v557 = vmax.f32 %v554, 0.0
  %v558 = vpack.c.bf16 %v557, %v557
  %v559 = vld [vmem:[%s10] sm:$0xf]
  %v560 = vld [vmem:[%s10 + $0x4] sm:$0xf]
  %v561 = vld [vmem:[%s10 + $0x8] sm:$0xf]
  %v562 = vld [vmem:[%s10 + $0xc] sm:$0xf]
  %v563 = vld [vmem:[%s10 + $0x10] sm:$0xf]
  %v564 = vld [vmem:[%s10 + $0x14] sm:$0xf]
  %v565 = vld [vmem:[%s10 + $0x18] sm:$0xf]
  %v566 = vld [vmem:[%s10 + $0x1c] sm:$0xf]
  %v567 = vld [vmem:[%s11] sm:$0x1]
  %v569 = vperm.slane %v567, 0
  %v579 = vunpack.c.l.b16 %v559
  %v580 = vunpack.c.l.b16 %v560
  %v581 = vunpack.c.l.b16 %v561
  %v582 = vunpack.c.l.b16 %v562
  %v583 = vunpack.c.l.b16 %v563
  %v584 = vunpack.c.l.b16 %v564
  %v585 = vunpack.c.l.b16 %v565
  %v586 = vunpack.c.l.b16 %v566
  %v587 = vpack.c.b16 %v580, %v579
  %v588 = vpack.c.b16 %v582, %v581
  %v589 = vpack.c.b16 %v584, %v583
  %v590 = vpack.c.b16 %v586, %v585
  %v596 = vsel %vm348, %v558, 0
  %598 = vmatpush.bf16.msra.mxu0 0
  %599 = vmatpush.bf16.msra.mxu0 0
  %600 = vmatpush.bf16.msra.mxu0 0
  %601 = vmatpush.bf16.msra.mxu0 0
  %602 = vmatpush.bf16.msra.mxu0 %v590
  %603 = vmatpush.bf16.msra.mxu0 %v589
  %604 = vmatpush.bf16.msra.mxu0 %v588
  %605 = vmatpush.bf16.msra.mxu0 %v587
  %606 = vmatmul.bf16.gmra.mxu0 %v596
  %v607 = vpop.f32.mrf.mxu0
  %v608 = vadd.f32 %v569, %v607
  %v609 = vpop.f32.mrf.mxu0
  %610 = vdwg.mxu0
  %vm611 = vcmask 517120
  %612 = vst.msk [vmem:[%s13] sm:$0x3] %vm611, %v608
  // Predicated region
  $region50: #{map_agent_forward.6} parent=0 // pred_check
    _
  $region51: #{map_agent_forward.6} parent=0 // pred_check_branch
    %614 = sbr.rel (0) target = $region53
  $region52: #{map_agent_forward.6} parent=0 // pred_region
    _
  $region53: #{map_agent_forward.6} parent=0 // pred_fallthru
    _
  // Predicated region
  $region54: #{map_agent_forward.6} parent=0 // pred_check
    _
  $region55: #{map_agent_forward.6} parent=0 // pred_check_branch
    %616 = sbr.rel (0) target = $region57
  $region56: #{map_agent_forward.6} parent=0 // pred_region
    _
  $region57: #{map_agent_forward.6} parent=0 // pred_fallthru
    _
  // Predicated region
  $region58: #{map_agent_forward.6} parent=0 // pred_check
    _
  $region59: #{map_agent_forward.6} parent=0 // pred_check_branch
    %618 = sbr.rel (0) target = $region61
  $region60: #{map_agent_forward.6} parent=0 // pred_region
    _
  $region61: #{map_agent_forward.6} parent=0 // pred_fallthru
    _
  // Predicated region
  $region62: #{map_agent_forward.6} parent=0 // pred_check
    _
  $region63: #{map_agent_forward.6} parent=0 // pred_check_branch
    %620 = sbr.rel (0) target = $region65
  $region64: #{map_agent_forward.6} parent=0 // pred_region
    _
  $region65: #{map_agent_forward.6} parent=0 // pred_fallthru
    _

// kernel: map_agent_forward.7
$region0: #{map_agent_forward.7}
  #allocation0 [shape = 'u32[]', space=smem, size = 0x4, offset = 0x4, fixed_abs, tag = 'smem constant byte address 0x4 - core index']
  #allocation1 [shape = 'u32[72,128]{1,0:T(1,128)}', space=vmem, size = 0x9000, scoped, tag = 'internal scratch']
  %s0 = inlined_call_operand.vmem [shape: bf16[2,128], index: 0, kind: input, shape index: {}]
  %s1 = inlined_call_operand.vmem [shape: bf16[128,128], index: 1, kind: input, shape index: {}]
  %s2 = inlined_call_operand.vmem [shape: f32[1,128], index: 2, kind: input, shape index: {}]
  %s3 = inlined_call_operand.vmem [shape: bf16[128,5], index: 3, kind: input, shape index: {}]
  %s4 = inlined_call_operand.vmem [shape: f32[1,5], index: 4, kind: input, shape index: {}]
  %s5 = inlined_call_operand.vmem [shape: f32[2,5], index: 5, kind: output, shape index: {}]
  %s6 = sld [smem:[#allocation0]]
  $region30: #{map_agent_forward.7} parent=0
    _
  %s8 = ssub.s32 1, %s6
  %s9 = scalar_select 0, %s8, %s6
  // Predicated region
  $region2: #{map_agent_forward.7} parent=0 // pred_check
    _
  $region3: #{map_agent_forward.7} parent=0 // pred_check_branch
    %11 = sbr.rel (0) target = $region5
  $region4: #{map_agent_forward.7} parent=0 // pred_region
    _
  $region5: #{map_agent_forward.7} parent=0 // pred_fallthru
    _
  // Predicated region
  $region6: #{map_agent_forward.7} parent=0 // pred_check
    _
  $region7: #{map_agent_forward.7} parent=0 // pred_check_branch
    %13 = sbr.rel (0) target = $region9
  $region8: #{map_agent_forward.7} parent=0 // pred_region
    _
  $region9: #{map_agent_forward.7} parent=0 // pred_fallthru
    _
  // Predicated region
  $region10: #{map_agent_forward.7} parent=0 // pred_check
    _
  $region11: #{map_agent_forward.7} parent=0 // pred_check_branch
    %15 = sbr.rel (0) target = $region13
  $region12: #{map_agent_forward.7} parent=0 // pred_region
    _
  $region13: #{map_agent_forward.7} parent=0 // pred_fallthru
    _
  // Predicated region
  $region14: #{map_agent_forward.7} parent=0 // pred_check
    _
  $region15: #{map_agent_forward.7} parent=0 // pred_check_branch
    %17 = sbr.rel (0) target = $region17
  $region16: #{map_agent_forward.7} parent=0 // pred_region
    _
  $region17: #{map_agent_forward.7} parent=0 // pred_fallthru
    _
  // Predicated region
  $region18: #{map_agent_forward.7} parent=0 // pred_check
    _
  $region19: #{map_agent_forward.7} parent=0 // pred_check_branch
    %19 = sbr.rel (0) target = $region21
  $region20: #{map_agent_forward.7} parent=0 // pred_region
    _
  $region21: #{map_agent_forward.7} parent=0 // pred_fallthru
    _
  %v20 = vld [vmem:[%s0] sm:$0x1]
  %v21 = vld [vmem:[%s1] sm:$0xf]
  %v22 = vld [vmem:[%s1 + $0x4] sm:$0xf]
  %v23 = vld [vmem:[%s1 + $0x8] sm:$0xf]
  %v24 = vld [vmem:[%s1 + $0xc] sm:$0xf]
  %v25 = vld [vmem:[%s1 + $0x10] sm:$0xf]
  %v26 = vld [vmem:[%s1 + $0x14] sm:$0xf]
  %v27 = vld [vmem:[%s1 + $0x18] sm:$0xf]
  %v28 = vld [vmem:[%s1 + $0x1c] sm:$0xf]
  %v29 = vld [vmem:[%s1 + $0x20] sm:$0xf]
  %v30 = vld [vmem:[%s1 + $0x24] sm:$0xf]
  %v31 = vld [vmem:[%s1 + $0x28] sm:$0xf]
  %v32 = vld [vmem:[%s1 + $0x2c] sm:$0xf]
  %v33 = vld [vmem:[%s1 + $0x30] sm:$0xf]
  %v34 = vld [vmem:[%s1 + $0x34] sm:$0xf]
  %v35 = vld [vmem:[%s1 + $0x38] sm:$0xf]
  %v36 = vld [vmem:[%s1 + $0x3c] sm:$0xf]
  %v37 = vld [vmem:[%s2] sm:$0x1]
  %v39 = vperm.slane %v37, 0
  %v57 = vunpack.c.l.b16 %v21
  %v58 = vunpack.c.l.b16 %v22
  %v59 = vunpack.c.l.b16 %v23
  %v60 = vunpack.c.l.b16 %v24
  %v61 = vunpack.c.l.b16 %v25
  %v62 = vunpack.c.l.b16 %v26
  %v63 = vunpack.c.l.b16 %v27
  %v64 = vunpack.c.l.b16 %v28
  %v65 = vunpack.c.l.b16 %v29
  %v66 = vunpack.c.l.b16 %v30
  %v67 = vunpack.c.l.b16 %v31
  %v68 = vunpack.c.l.b16 %v32
  %v69 = vunpack.c.l.b16 %v33
  %v70 = vunpack.c.l.b16 %v34
  %v71 = vunpack.c.l.b16 %v35
  %v72 = vunpack.c.l.b16 %v36
  %v73 = vpack.c.b16 %v58, %v57
  %v74 = vpack.c.b16 %v60, %v59
  %v75 = vpack.c.b16 %v62, %v61
  %v76 = vpack.c.b16 %v64, %v63
  %v77 = vpack.c.b16 %v66, %v65
  %v78 = vpack.c.b16 %v68, %v67
  %v79 = vpack.c.b16 %v70, %v69
  %v80 = vpack.c.b16 %v72, %v71
  %89 = vmatpush.bf16.msra.mxu0 %v80
  %90 = vmatpush.bf16.msra.mxu0 %v79
  %91 = vmatpush.bf16.msra.mxu0 %v78
  %92 = vmatpush.bf16.msra.mxu0 %v77
  %93 = vmatpush.bf16.msra.mxu0 %v76
  %94 = vmatpush.bf16.msra.mxu0 %v75
  %95 = vmatpush.bf16.msra.mxu0 %v74
  %96 = vmatpush.bf16.msra.mxu0 %v73
  %97 = vmatmul.bf16.gmra.mxu0 %v20
  %v98 = vpop.f32.mrf.mxu0
  %v99 = vadd.f32 %v39, %v98
  %v100 = vpop.f32.mrf.mxu0
  %101 = vdwg.mxu0
  %v102 = vmax.f32 %v99, 0.0
  %v103 = vpack.c.bf16 %v102, %v102
  %v104 = vld [vmem:[%s3] sm:$0xf]
  %v105 = vld [vmem:[%s3 + $0x4] sm:$0xf]
  %v106 = vld [vmem:[%s3 + $0x8] sm:$0xf]
  %v107 = vld [vmem:[%s3 + $0xc] sm:$0xf]
  %v108 = vld [vmem:[%s3 + $0x10] sm:$0xf]
  %v109 = vld [vmem:[%s3 + $0x14] sm:$0xf]
  %v110 = vld [vmem:[%s3 + $0x18] sm:$0xf]
  %v111 = vld [vmem:[%s3 + $0x1c] sm:$0xf]
  %v112 = vld [vmem:[%s3 + $0x20] sm:$0xf]
  %v113 = vld [vmem:[%s3 + $0x24] sm:$0xf]
  %v114 = vld [vmem:[%s3 + $0x28] sm:$0xf]
  %v115 = vld [vmem:[%s3 + $0x2c] sm:$0xf]
  %v116 = vld [vmem:[%s3 + $0x30] sm:$0xf]
  %v117 = vld [vmem:[%s3 + $0x34] sm:$0xf]
  %v118 = vld [vmem:[%s3 + $0x38] sm:$0xf]
  %v119 = vld [vmem:[%s3 + $0x3c] sm:$0xf]
  %v120 = vld [vmem:[%s4] sm:$0x1]
  %v122 = vperm.slane %v120, 0
  %v140 = vunpack.c.l.b16 %v104
  %v141 = vunpack.c.l.b16 %v105
  %v142 = vunpack.c.l.b16 %v106
  %v143 = vunpack.c.l.b16 %v107
  %v144 = vunpack.c.l.b16 %v108
  %v145 = vunpack.c.l.b16 %v109
  %v146 = vunpack.c.l.b16 %v110
  %v147 = vunpack.c.l.b16 %v111
  %v148 = vunpack.c.l.b16 %v112
  %v149 = vunpack.c.l.b16 %v113
  %v150 = vunpack.c.l.b16 %v114
  %v151 = vunpack.c.l.b16 %v115
  %v152 = vunpack.c.l.b16 %v116
  %v153 = vunpack.c.l.b16 %v117
  %v154 = vunpack.c.l.b16 %v118
  %v155 = vunpack.c.l.b16 %v119
  %v156 = vpack.c.b16 %v141, %v140
  %v157 = vpack.c.b16 %v143, %v142
  %v158 = vpack.c.b16 %v145, %v144
  %v159 = vpack.c.b16 %v147, %v146
  %v160 = vpack.c.b16 %v149, %v148
  %v161 = vpack.c.b16 %v151, %v150
  %v162 = vpack.c.b16 %v153, %v152
  %v163 = vpack.c.b16 %v155, %v154
  %172 = vmatpush.bf16.msra.mxu0 %v163
  %173 = vmatpush.bf16.msra.mxu0 %v162
  %174 = vmatpush.bf16.msra.mxu0 %v161
  %175 = vmatpush.bf16.msra.mxu0 %v160
  %176 = vmatpush.bf16.msra.mxu0 %v159
  %177 = vmatpush.bf16.msra.mxu0 %v158
  %178 = vmatpush.bf16.msra.mxu0 %v157
  %179 = vmatpush.bf16.msra.mxu0 %v156
  %180 = vmatmul.bf16.gmra.mxu0 %v103
  %v181 = vpop.f32.mrf.mxu0
  %v182 = vadd.f32 %v122, %v181
  %v183 = vpop.f32.mrf.mxu0
  %184 = vdwg.mxu0
  %vm185 = vcmask 33792
  %186 = vst.msk [vmem:[%s5] sm:$0x3] %vm185, %v182
  // Predicated region
  $region22: #{map_agent_forward.7} parent=0 // pred_check
    _
  $region23: #{map_agent_forward.7} parent=0 // pred_check_branch
    %188 = sbr.rel (0) target = $region25
  $region24: #{map_agent_forward.7} parent=0 // pred_region
    _
  $region25: #{map_agent_forward.7} parent=0 // pred_fallthru
    _
  // Predicated region
  $region26: #{map_agent_forward.7} parent=0 // pred_check
    _
  $region27: #{map_agent_forward.7} parent=0 // pred_check_branch
    %190 = sbr.rel (0) target = $region29
  $region28: #{map_agent_forward.7} parent=0 // pred_region
    _
  $region29: #{map_agent_forward.7} parent=0 // pred_fallthru
    _

</llo_original>
